<compile_context>
chip_gen: v7x
topology: tpu7x:2x2x1
jax: 0.10.0
libtpu: 0.0.40
codegen_flags: <defaults>
</compile_context>

<pallas_src>
import functools

import jax
import jax.numpy as jnp
from jax.experimental import pallas as pl
from jax.experimental.pallas import tpu as pltpu

_IN, _H1, _H2, _H3, _OUT = 28 * 28, 256, 128, 64, 10
_H3_PAD = 128    # fc3 output padded 64 -> 128 (lane-dense intermediate)
_OUT_PAD = 128   # fc4 output padded 10 -> 128 (lane-dense stores)


def _round_up(n, m):
    return (n + m - 1) // m * m


def _mlp_kernel(x_ref, w1_ref, b1_ref, w2_ref, b2_ref, w3_ref, b3_ref,
                w4_ref, b4_ref, o_ref):
    # x arrives f32; cast to bf16 on the VPU right before the MXU (the VPU has
    # slack under the MXU/DMA, and this avoids a separate XLA convert pass).
    x = x_ref[...].astype(jnp.bfloat16)
    # fc1 + relu (bf16 MXU inputs, f32 accumulation, f32 VPU epilogue)
    h = jnp.dot(x, w1_ref[...], preferred_element_type=jnp.float32)
    h = jnp.maximum(h + b1_ref[...], 0.0)
    # fc2 + relu
    h = jnp.dot(h.astype(jnp.bfloat16), w2_ref[...],
                preferred_element_type=jnp.float32)
    h = jnp.maximum(h + b2_ref[...], 0.0)
    # fc3 + relu (columns 64..127 are zero padding -> stay 0 through relu)
    h = jnp.dot(h.astype(jnp.bfloat16), w3_ref[...],
                preferred_element_type=jnp.float32)
    h = jnp.maximum(h + b3_ref[...], 0.0)
    # fc4 (no activation; columns 10..127 are zero padding)
    h = jnp.dot(h.astype(jnp.bfloat16), w4_ref[...],
                preferred_element_type=jnp.float32)
    o_ref[...] = (h + b4_ref[...]).astype(o_ref.dtype)


def prepare_params(params):
    """One-time parameter prep (pad + cast), hoisted out of the hot path.

    params: (w1, b1, w2, b2, w3, b3, w4, b4) with nn.Linear-equivalent
    shapes stored as (in, out) weights / (1, out) biases, float32.
    """
    w1, b1, w2, b2, w3, b3, w4, b4 = params
    # Zero-pad fc3 / fc4 output columns (and fc4 input rows) to 128 lanes.
    # Padded lanes stay exactly 0 through ReLU and contribute 0 to fc4.
    w3p = jnp.pad(w3, ((0, 0), (0, _H3_PAD - _H3)))
    b3p = jnp.pad(b3, ((0, 0), (0, _H3_PAD - _H3)))
    w4p = jnp.pad(w4, ((0, _H3_PAD - _H3), (0, _OUT_PAD - _OUT)))
    b4p = jnp.pad(b4, ((0, 0), (0, _OUT_PAD - _OUT)))
    # bf16 weights for the MXU; f32 biases for the VPU epilogue (v5e-safe).
    w1, w2, w3p, w4p = (w.astype(jnp.bfloat16) for w in (w1, w2, w3p, w4p))
    b1, b2, b3p, b4p = (b.astype(jnp.float32) for b in (b1, b2, b3p, b4p))
    return (w1, b1, w2, b2, w3p, b3p, w4p, b4p)


def _choose_batch_tile(batch, block_b):
    """Batch tile: >=16 rows (bf16 sublane pack), multiple of 16, >=2 grid
    steps whenever the batch permits (v7x has 2 TensorCores), multiple of 256
    when large (fills the 256-wide v6e/v7x MXU M dim)."""
    b16 = _round_up(batch, 16)
    bb = max(16, min(_round_up(block_b, 16), b16))
    if b16 <= bb and batch > 16:          # would be a single grid step
        bb = _round_up((batch + 1) // 2, 16)
    if bb >= 512:
        bb = bb // 256 * 256
    return bb


@functools.partial(jax.jit, static_argnames=("block_b",))
def simple_nn_forward(x, prepared_params, *, block_b=1024):
    """x: (B, 1, 28, 28) or (B, 784) float32; prepared_params from
    prepare_params(). Returns (B, 10) float32."""
    x2d = x.reshape(-1, _IN).astype(jnp.float32)   # == torch .view(-1, 784)
    B = x2d.shape[0]

    bb = _choose_batch_tile(B, block_b)
    B_pad = _round_up(B, bb)
    if B_pad != B:
        x2d = jnp.pad(x2d, ((0, B_pad - B), (0, 0)))

    w1, b1, w2, b2, w3p, b3p, w4p, b4p = prepared_params

    grid = (B_pad // bb,)

    def full_spec(arr):
        # Whole-array block, constant index map -> weights stay VMEM-resident.
        n = arr.ndim
        return pl.BlockSpec(arr.shape, lambda i, n=n: (0,) * n)

    in_specs = [
        pl.BlockSpec((bb, _IN), lambda i: (i, 0)),   # f32 x tile over batch
        full_spec(w1), full_spec(b1),
        full_spec(w2), full_spec(b2),
        full_spec(w3p), full_spec(b3p),
        full_spec(w4p), full_spec(b4p),
    ]
    out_spec = pl.BlockSpec((bb, _OUT_PAD), lambda i: (i, 0))

    flops = 2 * B_pad * (_IN * _H1 + _H1 * _H2 + _H2 * _H3_PAD
                         + _H3_PAD * _OUT_PAD)
    weight_bytes = (2 * (_IN * _H1 + _H1 * _H2 + _H2 * _H3_PAD
                         + _H3_PAD * _OUT_PAD)
                    + 4 * (_H1 + _H2 + _H3_PAD + _OUT_PAD))
    bytes_accessed = B_pad * _IN * 4 + B_pad * _OUT_PAD * 4 + weight_bytes

    # VMEM budget: double-buffered x/out tiles + resident weights + f32
    # intermediates. 2x headroom, floor 32 MiB, cap 48 MiB (v7x has 64 MiB
    # physical per TensorCore; v5e/v6e have 128 MiB).
    vmem_est = (2 * bb * _IN * 4 + 2 * bb * _OUT_PAD * 4 + 2 * weight_bytes
                + bb * (_H1 + _H2 + _H3_PAD + _OUT_PAD) * 4)
    vmem_limit = int(min(max(2 * vmem_est, 32 * 2**20), 48 * 2**20))

    out = pl.pallas_call(
        _mlp_kernel,
        out_shape=jax.ShapeDtypeStruct((B_pad, _OUT_PAD), jnp.float32),
        grid_spec=pltpu.PrefetchScalarGridSpec(
            num_scalar_prefetch=0,
            grid=grid,
            in_specs=in_specs,
            out_specs=out_spec,
        ),
        compiler_params=pltpu.CompilerParams(
            dimension_semantics=("parallel",),
            vmem_limit_bytes=vmem_limit),
        cost_estimate=pl.CostEstimate(
            flops=flops, transcendentals=0, bytes_accessed=bytes_accessed),
    )(x2d, w1, b1, w2, b2, w3p, b3p, w4p, b4p)

    # TODO(synk): consumers that tolerate the padded (B_pad, 128) buffer can
    # skip this slice and save one small extra HBM pass.
    return out[:B, :_OUT]


def init_params(key):
    """Deterministic init matching nn.Linear shapes (stored as (in, out))."""
    dims = [(_IN, _H1), (_H1, _H2), (_H2, _H3), (_H3, _OUT)]
    params = []
    for fan_in, fan_out in dims:
        kw, kb, key = jax.random.split(key, 3)
        bound = 1.0 / jnp.sqrt(fan_in)
        w = jax.random.uniform(kw, (fan_in, fan_out), jnp.float32, -bound, bound)
        b = jax.random.uniform(kb, (1, fan_out), jnp.float32, -bound, bound)
        params.extend([w, b])
    return tuple(params)


def _ref_forward(x, params):
    """Pure-JAX reference using the same bf16-input / f32-accum math."""
    w1, b1, w2, b2, w3, b3, w4, b4 = params
    bf = jnp.bfloat16
    h = x.reshape(-1, _IN).astype(bf)
    h = jnp.maximum(jnp.dot(h, w1.astype(bf),
                            preferred_element_type=jnp.float32) + b1, 0.0)
    h = jnp.maximum(jnp.dot(h.astype(bf), w2.astype(bf),
                            preferred_element_type=jnp.float32) + b2, 0.0)
    h = jnp.maximum(jnp.dot(h.astype(bf), w3.astype(bf),
                            preferred_element_type=jnp.float32) + b3, 0.0)
    return jnp.dot(h.astype(bf), w4.astype(bf),
                   preferred_element_type=jnp.float32) + b4


if __name__ == "__main__":
    key = jax.random.PRNGKey(0)
    kx, kp = jax.random.split(key)

    # Small MNIST-like ragged batch (B=30, C=1, H=28, W=28), NCHW like PyTorch.
    # The tile chooser picks bb=16 -> batch padded to 32 with 2 grid steps,
    # exercising the pipeline, ragged-batch padding, and v7x megacore sharding
    # at small scale.
    x = jax.random.normal(kx, (30, 1, 28, 28), dtype=jnp.float32)
    params = init_params(kp)
    prepped = prepare_params(params)   # one-time prep, out of the hot path

    out = simple_nn_forward(x, prepped)
    out = jax.block_until_ready(out)
    assert out.shape == (30, 10) and out.dtype == jnp.float32

    ref = _ref_forward(x, params)
    assert jnp.allclose(out, ref, atol=1e-2, rtol=1e-2)

    print("KERNEL_OK")
</pallas_src>

<mosaic_0001>
module attributes {stable_mosaic.version = 11 : i64} {
  func.func @_mlp_kernel(%arg0: i32, %arg1: memref<16x784xf32, #tpu.memory_space<vmem>>, %arg2: memref<784x256xbf16, #tpu.memory_space<vmem>>, %arg3: memref<1x256xf32, #tpu.memory_space<vmem>>, %arg4: memref<256x128xbf16, #tpu.memory_space<vmem>>, %arg5: memref<1x128xf32, #tpu.memory_space<vmem>>, %arg6: memref<128x128xbf16, #tpu.memory_space<vmem>>, %arg7: memref<1x128xf32, #tpu.memory_space<vmem>>, %arg8: memref<128x128xbf16, #tpu.memory_space<vmem>>, %arg9: memref<1x128xf32, #tpu.memory_space<vmem>>, %arg10: memref<16x128xf32, #tpu.memory_space<vmem>>) attributes {dimension_semantics = [#tpu.dimension_semantics<parallel>], iteration_bounds = array<i64: 2>, scalar_prefetch = 0 : i64, scratch_operands = 0 : i64, tpu.core_type = #tpu.core_type<tc>, window_params = [{transform_indices = @transform_0, window_bounds = array<i64: 16, 784>}, {pipeline_mode = #tpu.pipeline_mode<synchronous>, transform_indices = @transform_1, window_bounds = array<i64: 784, 256>}, {pipeline_mode = #tpu.pipeline_mode<synchronous>, transform_indices = @transform_2, window_bounds = array<i64: 1, 256>}, {pipeline_mode = #tpu.pipeline_mode<synchronous>, transform_indices = @transform_3, window_bounds = array<i64: 256, 128>}, {pipeline_mode = #tpu.pipeline_mode<synchronous>, transform_indices = @transform_4, window_bounds = array<i64: 1, 128>}, {pipeline_mode = #tpu.pipeline_mode<synchronous>, transform_indices = @transform_5, window_bounds = array<i64: 128, 128>}, {pipeline_mode = #tpu.pipeline_mode<synchronous>, transform_indices = @transform_6, window_bounds = array<i64: 1, 128>}, {pipeline_mode = #tpu.pipeline_mode<synchronous>, transform_indices = @transform_7, window_bounds = array<i64: 128, 128>}, {pipeline_mode = #tpu.pipeline_mode<synchronous>, transform_indices = @transform_8, window_bounds = array<i64: 1, 128>}, {transform_indices = @transform_9, window_bounds = array<i64: 16, 128>}]} {
    %c0 = arith.constant 0 : index
    %c0_0 = arith.constant 0 : index
    %0 = vector.load %arg1[%c0, %c0_0] : memref<16x784xf32, #tpu.memory_space<vmem>>, vector<16x784xf32>
    %1 = arith.truncf %0 : vector<16x784xf32> to vector<16x784xbf16>
    %c0_1 = arith.constant 0 : index
    %c0_2 = arith.constant 0 : index
    %2 = vector.load %arg2[%c0_1, %c0_2] : memref<784x256xbf16, #tpu.memory_space<vmem>>, vector<784x256xbf16>
    %cst = arith.constant dense<0.000000e+00> : vector<16x256xf32>
    %3 = tpu.matmul %1, %2, %cst {dimension_numbers = #tpu.dot_dimension_numbers<[1], [0], [0], [1], [0, 0, 1, 1], [], []>} : vector<16x784xbf16>, vector<784x256xbf16>, vector<16x256xf32> -> vector<16x256xf32>
    %c0_3 = arith.constant 0 : index
    %c0_4 = arith.constant 0 : index
    %4 = vector.load %arg3[%c0_3, %c0_4] : memref<1x256xf32, #tpu.memory_space<vmem>>, vector<1x256xf32>
    %5 = vector.broadcast %4 : vector<1x256xf32> to vector<16x256xf32>
    %6 = arith.addf %3, %5 : vector<16x256xf32>
    %cst_5 = arith.constant 0.000000e+00 : f32
    %7 = vector.broadcast %cst_5 : f32 to vector<16x256xf32>
    %8 = arith.maximumf %6, %7 : vector<16x256xf32>
    %9 = arith.truncf %8 : vector<16x256xf32> to vector<16x256xbf16>
    %c0_6 = arith.constant 0 : index
    %c0_7 = arith.constant 0 : index
    %10 = vector.load %arg4[%c0_6, %c0_7] : memref<256x128xbf16, #tpu.memory_space<vmem>>, vector<256x128xbf16>
    %cst_8 = arith.constant dense<0.000000e+00> : vector<16x128xf32>
    %11 = tpu.matmul %9, %10, %cst_8 {dimension_numbers = #tpu.dot_dimension_numbers<[1], [0], [0], [1], [0, 0, 1, 1], [], []>} : vector<16x256xbf16>, vector<256x128xbf16>, vector<16x128xf32> -> vector<16x128xf32>
    %c0_9 = arith.constant 0 : index
    %c0_10 = arith.constant 0 : index
    %12 = vector.load %arg5[%c0_9, %c0_10] : memref<1x128xf32, #tpu.memory_space<vmem>>, vector<1x128xf32>
    %13 = vector.broadcast %12 : vector<1x128xf32> to vector<16x128xf32>
    %14 = arith.addf %11, %13 : vector<16x128xf32>
    %cst_11 = arith.constant 0.000000e+00 : f32
    %15 = vector.broadcast %cst_11 : f32 to vector<16x128xf32>
    %16 = arith.maximumf %14, %15 : vector<16x128xf32>
    %17 = arith.truncf %16 : vector<16x128xf32> to vector<16x128xbf16>
    %c0_12 = arith.constant 0 : index
    %c0_13 = arith.constant 0 : index
    %18 = vector.load %arg6[%c0_12, %c0_13] : memref<128x128xbf16, #tpu.memory_space<vmem>>, vector<128x128xbf16>
    %cst_14 = arith.constant dense<0.000000e+00> : vector<16x128xf32>
    %19 = tpu.matmul %17, %18, %cst_14 {dimension_numbers = #tpu.dot_dimension_numbers<[1], [0], [0], [1], [0, 0, 1, 1], [], []>} : vector<16x128xbf16>, vector<128x128xbf16>, vector<16x128xf32> -> vector<16x128xf32>
    %c0_15 = arith.constant 0 : index
    %c0_16 = arith.constant 0 : index
    %20 = vector.load %arg7[%c0_15, %c0_16] : memref<1x128xf32, #tpu.memory_space<vmem>>, vector<1x128xf32>
    %21 = vector.broadcast %20 : vector<1x128xf32> to vector<16x128xf32>
    %22 = arith.addf %19, %21 : vector<16x128xf32>
    %cst_17 = arith.constant 0.000000e+00 : f32
    %23 = vector.broadcast %cst_17 : f32 to vector<16x128xf32>
    %24 = arith.maximumf %22, %23 : vector<16x128xf32>
    %25 = arith.truncf %24 : vector<16x128xf32> to vector<16x128xbf16>
    %c0_18 = arith.constant 0 : index
    %c0_19 = arith.constant 0 : index
    %26 = vector.load %arg8[%c0_18, %c0_19] : memref<128x128xbf16, #tpu.memory_space<vmem>>, vector<128x128xbf16>
    %cst_20 = arith.constant dense<0.000000e+00> : vector<16x128xf32>
    %27 = tpu.matmul %25, %26, %cst_20 {dimension_numbers = #tpu.dot_dimension_numbers<[1], [0], [0], [1], [0, 0, 1, 1], [], []>} : vector<16x128xbf16>, vector<128x128xbf16>, vector<16x128xf32> -> vector<16x128xf32>
    %c0_21 = arith.constant 0 : index
    %c0_22 = arith.constant 0 : index
    %28 = vector.load %arg9[%c0_21, %c0_22] : memref<1x128xf32, #tpu.memory_space<vmem>>, vector<1x128xf32>
    %29 = vector.broadcast %28 : vector<1x128xf32> to vector<16x128xf32>
    %30 = arith.addf %27, %29 : vector<16x128xf32>
    %c0_23 = arith.constant 0 : index
    %c0_24 = arith.constant 0 : index
    %31 = vector.load %arg10[%c0_23, %c0_24] : memref<16x128xf32, #tpu.memory_space<vmem>>, vector<16x128xf32>
    tpu.vector_store %arg10[%c0_23, %c0_24], %30 {strides = array<i32>} : memref<16x128xf32, #tpu.memory_space<vmem>>, vector<16x128xf32>,
    return
  }
  func.func @transform_0(%arg0: i32) -> (i32, i32) {
    %c0_i32 = arith.constant 0 : i32
    %c0_i32_0 = arith.constant 0 : i32
    return %arg0, %c0_i32 : i32, i32
  }
  func.func @transform_1(%arg0: i32) -> (i32, i32) {
    %c0_i32 = arith.constant 0 : i32
    %c0_i32_0 = arith.constant 0 : i32
    %c0_i32_1 = arith.constant 0 : i32
    return %c0_i32, %c0_i32_0 : i32, i32
  }
  func.func @transform_2(%arg0: i32) -> (i32, i32) {
    %c0_i32 = arith.constant 0 : i32
    %c0_i32_0 = arith.constant 0 : i32
    %c0_i32_1 = arith.constant 0 : i32
    return %c0_i32, %c0_i32_0 : i32, i32
  }
  func.func @transform_3(%arg0: i32) -> (i32, i32) {
    %c0_i32 = arith.constant 0 : i32
    %c0_i32_0 = arith.constant 0 : i32
    %c0_i32_1 = arith.constant 0 : i32
    return %c0_i32, %c0_i32_0 : i32, i32
  }
  func.func @transform_4(%arg0: i32) -> (i32, i32) {
    %c0_i32 = arith.constant 0 : i32
    %c0_i32_0 = arith.constant 0 : i32
    %c0_i32_1 = arith.constant 0 : i32
    return %c0_i32, %c0_i32_0 : i32, i32
  }
  func.func @transform_5(%arg0: i32) -> (i32, i32) {
    %c0_i32 = arith.constant 0 : i32
    %c0_i32_0 = arith.constant 0 : i32
    %c0_i32_1 = arith.constant 0 : i32
    return %c0_i32, %c0_i32_0 : i32, i32
  }
  func.func @transform_6(%arg0: i32) -> (i32, i32) {
    %c0_i32 = arith.constant 0 : i32
    %c0_i32_0 = arith.constant 0 : i32
    %c0_i32_1 = arith.constant 0 : i32
    return %c0_i32, %c0_i32_0 : i32, i32
  }
  func.func @transform_7(%arg0: i32) -> (i32, i32) {
    %c0_i32 = arith.constant 0 : i32
    %c0_i32_0 = arith.constant 0 : i32
    %c0_i32_1 = arith.constant 0 : i32
    return %c0_i32, %c0_i32_0 : i32, i32
  }
  func.func @transform_8(%arg0: i32) -> (i32, i32) {
    %c0_i32 = arith.constant 0 : i32
    %c0_i32_0 = arith.constant 0 : i32
    %c0_i32_1 = arith.constant 0 : i32
    return %c0_i32, %c0_i32_0 : i32, i32
  }
  func.func @transform_9(%arg0: i32) -> (i32, i32) {
    %c0_i32 = arith.constant 0 : i32
    %c0_i32_0 = arith.constant 0 : i32
    return %arg0, %c0_i32 : i32, i32
  }
}

</mosaic_0001>

<llo_original>
// kernel: simple_nn_forward.1
$region0: #{simple_nn_forward.1}
  #allocation0 [shape = 'u32[]', space=smem, size = 0x4, offset = 0x4, fixed_abs, tag = 'smem constant byte address 0x4 - core index']
  #allocation1 [shape = 'u32[144,128]{1,0:T(1,128)}', space=vmem, size = 0x12000, scoped, tag = 'internal scratch']
  %s0 = inlined_call_operand.vmem [shape: f32[32,784], index: 0, kind: input, shape index: {}]
  %s1 = inlined_call_operand.vmem [shape: bf16[784,256], index: 1, kind: input, shape index: {}]
  %s2 = inlined_call_operand.vmem [shape: f32[1,256], index: 2, kind: input, shape index: {}]
  %s3 = inlined_call_operand.vmem [shape: bf16[256,128], index: 3, kind: input, shape index: {}]
  %s4 = inlined_call_operand.vmem [shape: f32[1,128], index: 4, kind: input, shape index: {}]
  %s5 = inlined_call_operand.vmem [shape: bf16[128,128], index: 5, kind: input, shape index: {}]
  %s6 = inlined_call_operand.vmem [shape: f32[1,128], index: 6, kind: input, shape index: {}]
  %s7 = inlined_call_operand.vmem [shape: bf16[128,128], index: 7, kind: input, shape index: {}]
  %s8 = inlined_call_operand.vmem [shape: f32[1,128], index: 8, kind: input, shape index: {}]
  %s9 = inlined_call_operand.vmem [shape: f32[32,128], index: 9, kind: output, shape index: {}]
  %s10 = sld [smem:[#allocation0]]
  $region69: #{simple_nn_forward.1} parent=0
    _
  %s12 = ssub.s32 1, %s10
  %s13 = scalar_select 0, %s12, %s10
  loop: start=0, step=1, limit=4
  $region2: #{simple_nn_forward.1} parent=0 // loop_pre_header
    _
  $region3: #{simple_nn_forward.1} parent=0 // loop_header
    %s15 = sphi 0, %s19
    %p16 = scmp.ge.s32.totalorder %s15, 4
    %s25 = sphi 0, %s27
    %s28 = sphi 0, %s25
    %s29 = sphi 0, %s28
    %s45 = sphi 0, %s29
    %s49 = sphi 0, %s49
    %s51 = sphi 0, %s49
    %s52 = sphi 0, %s51
    %s66 = sphi 0, %s52
    %s70 = sphi 0, %s70
    %s72 = sphi 0, %s70
    %s73 = sphi 0, %s72
    %s87 = sphi 0, %s73
    %s91 = sphi 0, %s91
    %s93 = sphi 0, %s91
    %s94 = sphi 0, %s93
    %s108 = sphi 0, %s94
    %s112 = sphi 0, %s112
    %s114 = sphi 0, %s112
    %s115 = sphi 0, %s114
    %s129 = sphi 0, %s115
    %s133 = sphi 0, %s133
    %s135 = sphi 0, %s133
    %s136 = sphi 0, %s135
    %s150 = sphi 0, %s136
    %s154 = sphi 0, %s154
    %s156 = sphi 0, %s154
    %s157 = sphi 0, %s156
    %s171 = sphi 0, %s157
    %s175 = sphi 0, %s175
    %s177 = sphi 0, %s175
    %s178 = sphi 0, %s177
    %s192 = sphi 0, %s178
    %s196 = sphi 0, %s196
    %s198 = sphi 0, %s196
    %s199 = sphi 0, %s198
    %s213 = sphi 0, %s199
    %s219 = sphi 0, %s221
    %s222 = sphi 0, %s219
    %s223 = sphi 0, %s222
    %s239 = sphi 0, %s223
  $region4: #{simple_nn_forward.1} parent=0 // loop_header_branch
    %18 = sbr.rel (%p16) target = $region8
  $region5: #{simple_nn_forward.1} parent=0 // loop_body
    %s20 = ssub.s32 %s15, 1
    %s21 = ssub.s32 %s15, 2
    %s22 = sadd.s32 %s15, 1
    %s23 = ssub.s32 %s15, %s22
    %p24 = scmp.eq.s32.totalorder %s23, 0
    %s26 = sadd.s32 %s25, 1
    %s27 = scalar_select %p24, %s25, %s26
    %p30 = pneg %p24
    %p31 = scmp.eq.s32.totalorder %s15, 1
    %p32 = por %p30, %p31
    %p33 = scmp.ne.s32.totalorder %s25, %s28
    %p34 = scmp.eq.s32.totalorder %s15, 0
    %p35 = por %p33, %p34
    %p36 = scmp.ne.s32.totalorder %s25, %s28
    %p37 = scmp.eq.s32.totalorder %s20, 1
    %p38 = por %p36, %p37
    %p39 = scmp.ne.s32.totalorder %s28, %s29
    %p40 = scmp.eq.s32.totalorder %s20, 0
    %p41 = por %p39, %p40
    %p42 = scmp.ne.s32.totalorder %s28, %s29
    %p43 = scmp.eq.s32.totalorder %s21, 1
    %p44 = por %p42, %p43
    %p46 = scmp.ne.s32.totalorder %s29, %s45
    %p47 = scmp.eq.s32.totalorder %s21, 0
    %p48 = por %p46, %p47
    %s50 = sadd.s32 %s49, 1
    %p53 = scmp.eq.s32.totalorder %s15, 1
    %p54 = scmp.ne.s32.totalorder %s49, %s51
    %p55 = scmp.eq.s32.totalorder %s15, 0
    %p56 = por %p54, %p55
    %p57 = scmp.ne.s32.totalorder %s49, %s51
    %p58 = scmp.eq.s32.totalorder %s20, 1
    %p59 = por %p57, %p58
    %p60 = scmp.ne.s32.totalorder %s51, %s52
    %p61 = scmp.eq.s32.totalorder %s20, 0
    %p62 = por %p60, %p61
    %p63 = scmp.ne.s32.totalorder %s51, %s52
    %p64 = scmp.eq.s32.totalorder %s21, 1
    %p65 = por %p63, %p64
    %p67 = scmp.ne.s32.totalorder %s52, %s66
    %p68 = scmp.eq.s32.totalorder %s21, 0
    %p69 = por %p67, %p68
    %s71 = sadd.s32 %s70, 1
    %p74 = scmp.eq.s32.totalorder %s15, 1
    %p75 = scmp.ne.s32.totalorder %s70, %s72
    %p76 = scmp.eq.s32.totalorder %s15, 0
    %p77 = por %p75, %p76
    %p78 = scmp.ne.s32.totalorder %s70, %s72
    %p79 = scmp.eq.s32.totalorder %s20, 1
    %p80 = por %p78, %p79
    %p81 = scmp.ne.s32.totalorder %s72, %s73
    %p82 = scmp.eq.s32.totalorder %s20, 0
    %p83 = por %p81, %p82
    %p84 = scmp.ne.s32.totalorder %s72, %s73
    %p85 = scmp.eq.s32.totalorder %s21, 1
    %p86 = por %p84, %p85
    %p88 = scmp.ne.s32.totalorder %s73, %s87
    %p89 = scmp.eq.s32.totalorder %s21, 0
    %p90 = por %p88, %p89
    %s92 = sadd.s32 %s91, 1
    %p95 = scmp.eq.s32.totalorder %s15, 1
    %p96 = scmp.ne.s32.totalorder %s91, %s93
    %p97 = scmp.eq.s32.totalorder %s15, 0
    %p98 = por %p96, %p97
    %p99 = scmp.ne.s32.totalorder %s91, %s93
    %p100 = scmp.eq.s32.totalorder %s20, 1
    %p101 = por %p99, %p100
    %p102 = scmp.ne.s32.totalorder %s93, %s94
    %p103 = scmp.eq.s32.totalorder %s20, 0
    %p104 = por %p102, %p103
    %p105 = scmp.ne.s32.totalorder %s93, %s94
    %p106 = scmp.eq.s32.totalorder %s21, 1
    %p107 = por %p105, %p106
    %p109 = scmp.ne.s32.totalorder %s94, %s108
    %p110 = scmp.eq.s32.totalorder %s21, 0
    %p111 = por %p109, %p110
    %s113 = sadd.s32 %s112, 1
    %p116 = scmp.eq.s32.totalorder %s15, 1
    %p117 = scmp.ne.s32.totalorder %s112, %s114
    %p118 = scmp.eq.s32.totalorder %s15, 0
    %p119 = por %p117, %p118
    %p120 = scmp.ne.s32.totalorder %s112, %s114
    %p121 = scmp.eq.s32.totalorder %s20, 1
    %p122 = por %p120, %p121
    %p123 = scmp.ne.s32.totalorder %s114, %s115
    %p124 = scmp.eq.s32.totalorder %s20, 0
    %p125 = por %p123, %p124
    %p126 = scmp.ne.s32.totalorder %s114, %s115
    %p127 = scmp.eq.s32.totalorder %s21, 1
    %p128 = por %p126, %p127
    %p130 = scmp.ne.s32.totalorder %s115, %s129
    %p131 = scmp.eq.s32.totalorder %s21, 0
    %p132 = por %p130, %p131
    %s134 = sadd.s32 %s133, 1
    %p137 = scmp.eq.s32.totalorder %s15, 1
    %p138 = scmp.ne.s32.totalorder %s133, %s135
    %p139 = scmp.eq.s32.totalorder %s15, 0
    %p140 = por %p138, %p139
    %p141 = scmp.ne.s32.totalorder %s133, %s135
    %p142 = scmp.eq.s32.totalorder %s20, 1
    %p143 = por %p141, %p142
    %p144 = scmp.ne.s32.totalorder %s135, %s136
    %p145 = scmp.eq.s32.totalorder %s20, 0
    %p146 = por %p144, %p145
    %p147 = scmp.ne.s32.totalorder %s135, %s136
    %p148 = scmp.eq.s32.totalorder %s21, 1
    %p149 = por %p147, %p148
    %p151 = scmp.ne.s32.totalorder %s136, %s150
    %p152 = scmp.eq.s32.totalorder %s21, 0
    %p153 = por %p151, %p152
    %s155 = sadd.s32 %s154, 1
    %p158 = scmp.eq.s32.totalorder %s15, 1
    %p159 = scmp.ne.s32.totalorder %s154, %s156
    %p160 = scmp.eq.s32.totalorder %s15, 0
    %p161 = por %p159, %p160
    %p162 = scmp.ne.s32.totalorder %s154, %s156
    %p163 = scmp.eq.s32.totalorder %s20, 1
    %p164 = por %p162, %p163
    %p165 = scmp.ne.s32.totalorder %s156, %s157
    %p166 = scmp.eq.s32.totalorder %s20, 0
    %p167 = por %p165, %p166
    %p168 = scmp.ne.s32.totalorder %s156, %s157
    %p169 = scmp.eq.s32.totalorder %s21, 1
    %p170 = por %p168, %p169
    %p172 = scmp.ne.s32.totalorder %s157, %s171
    %p173 = scmp.eq.s32.totalorder %s21, 0
    %p174 = por %p172, %p173
    %s176 = sadd.s32 %s175, 1
    %p179 = scmp.eq.s32.totalorder %s15, 1
    %p180 = scmp.ne.s32.totalorder %s175, %s177
    %p181 = scmp.eq.s32.totalorder %s15, 0
    %p182 = por %p180, %p181
    %p183 = scmp.ne.s32.totalorder %s175, %s177
    %p184 = scmp.eq.s32.totalorder %s20, 1
    %p185 = por %p183, %p184
    %p186 = scmp.ne.s32.totalorder %s177, %s178
    %p187 = scmp.eq.s32.totalorder %s20, 0
    %p188 = por %p186, %p187
    %p189 = scmp.ne.s32.totalorder %s177, %s178
    %p190 = scmp.eq.s32.totalorder %s21, 1
    %p191 = por %p189, %p190
    %p193 = scmp.ne.s32.totalorder %s178, %s192
    %p194 = scmp.eq.s32.totalorder %s21, 0
    %p195 = por %p193, %p194
    %s197 = sadd.s32 %s196, 1
    %p200 = scmp.eq.s32.totalorder %s15, 1
    %p201 = scmp.ne.s32.totalorder %s196, %s198
    %p202 = scmp.eq.s32.totalorder %s15, 0
    %p203 = por %p201, %p202
    %p204 = scmp.ne.s32.totalorder %s196, %s198
    %p205 = scmp.eq.s32.totalorder %s20, 1
    %p206 = por %p204, %p205
    %p207 = scmp.ne.s32.totalorder %s198, %s199
    %p208 = scmp.eq.s32.totalorder %s20, 0
    %p209 = por %p207, %p208
    %p210 = scmp.ne.s32.totalorder %s198, %s199
    %p211 = scmp.eq.s32.totalorder %s21, 1
    %p212 = por %p210, %p211
    %p214 = scmp.ne.s32.totalorder %s199, %s213
    %p215 = scmp.eq.s32.totalorder %s21, 0
    %p216 = por %p214, %p215
    %s217 = ssub.s32 %s15, %s22
    %p218 = scmp.eq.s32.totalorder %s217, 0
    %s220 = sadd.s32 %s219, 1
    %s221 = scalar_select %p218, %s219, %s220
    %p224 = pneg %p218
    %p225 = scmp.eq.s32.totalorder %s15, 1
    %p226 = por %p224, %p225
    %p227 = scmp.ne.s32.totalorder %s219, %s222
    %p228 = scmp.eq.s32.totalorder %s15, 0
    %p229 = por %p227, %p228
    %p230 = scmp.ne.s32.totalorder %s219, %s222
    %p231 = scmp.eq.s32.totalorder %s20, 1
    %p232 = por %p230, %p231
    %p233 = scmp.ne.s32.totalorder %s222, %s223
    %p234 = scmp.eq.s32.totalorder %s20, 0
    %p235 = por %p233, %p234
    %p236 = scmp.ne.s32.totalorder %s222, %s223
    %p237 = scmp.eq.s32.totalorder %s21, 1
    %p238 = por %p236, %p237
    %p240 = scmp.ne.s32.totalorder %s223, %s239
    %p241 = scmp.eq.s32.totalorder %s21, 0
    %p242 = por %p240, %p241
    %p243 = scmp.le.s32.totalorder 1, %s15
    %p244 = scmp.lt.s32.totalorder %s15, 3
    %p245 = pnand %p243, %p244
    %p246 = pneg %p245
    // Predicated region
    $region9: #{simple_nn_forward.1} parent=5 // pred_check
      _
    $region10: #{simple_nn_forward.1} parent=5 // pred_check_branch
      %248 = sbr.rel (%p245) target = $region12
    $region11: #{simple_nn_forward.1} parent=5 // pred_region
      %s249 = ssub.s32 %s15, 1
      // Predicated region
      $region13: #{simple_nn_forward.1} parent=11 // pred_check
        %p250 = pneg %p62
      $region14: #{simple_nn_forward.1} parent=11 // pred_check_branch
        %252 = sbr.rel (%p250) target = $region16
      $region15: #{simple_nn_forward.1} parent=11 // pred_region
        _
      $region16: #{simple_nn_forward.1} parent=11 // pred_fallthru
        _
      // Predicated region
      $region17: #{simple_nn_forward.1} parent=11 // pred_check
        %p253 = pneg %p83
      $region18: #{simple_nn_forward.1} parent=11 // pred_check_branch
        %255 = sbr.rel (%p253) target = $region20
      $region19: #{simple_nn_forward.1} parent=11 // pred_region
        _
      $region20: #{simple_nn_forward.1} parent=11 // pred_fallthru
        _
      // Predicated region
      $region21: #{simple_nn_forward.1} parent=11 // pred_check
        %p256 = pneg %p104
      $region22: #{simple_nn_forward.1} parent=11 // pred_check_branch
        %258 = sbr.rel (%p256) target = $region24
      $region23: #{simple_nn_forward.1} parent=11 // pred_region
        _
      $region24: #{simple_nn_forward.1} parent=11 // pred_fallthru
        _
      // Predicated region
      $region25: #{simple_nn_forward.1} parent=11 // pred_check
        %p259 = pneg %p125
      $region26: #{simple_nn_forward.1} parent=11 // pred_check_branch
        %261 = sbr.rel (%p259) target = $region28
      $region27: #{simple_nn_forward.1} parent=11 // pred_region
        _
      $region28: #{simple_nn_forward.1} parent=11 // pred_fallthru
        _
      // Predicated region
      $region29: #{simple_nn_forward.1} parent=11 // pred_check
        %p262 = pneg %p146
      $region30: #{simple_nn_forward.1} parent=11 // pred_check_branch
        %264 = sbr.rel (%p262) target = $region32
      $region31: #{simple_nn_forward.1} parent=11 // pred_region
        _
      $region32: #{simple_nn_forward.1} parent=11 // pred_fallthru
        _
      // Predicated region
      $region33: #{simple_nn_forward.1} parent=11 // pred_check
        %p265 = pneg %p167
      $region34: #{simple_nn_forward.1} parent=11 // pred_check_branch
        %267 = sbr.rel (%p265) target = $region36
      $region35: #{simple_nn_forward.1} parent=11 // pred_region
        _
      $region36: #{simple_nn_forward.1} parent=11 // pred_fallthru
        _
      // Predicated region
      $region37: #{simple_nn_forward.1} parent=11 // pred_check
        %p268 = pneg %p188
      $region38: #{simple_nn_forward.1} parent=11 // pred_check_branch
        %270 = sbr.rel (%p268) target = $region40
      $region39: #{simple_nn_forward.1} parent=11 // pred_region
        _
      $region40: #{simple_nn_forward.1} parent=11 // pred_fallthru
        _
      // Predicated region
      $region41: #{simple_nn_forward.1} parent=11 // pred_check
        %p271 = pneg %p209
      $region42: #{simple_nn_forward.1} parent=11 // pred_check_branch
        %273 = sbr.rel (%p271) target = $region44
      $region43: #{simple_nn_forward.1} parent=11 // pred_region
        _
      $region44: #{simple_nn_forward.1} parent=11 // pred_fallthru
        _
    $region12: #{simple_nn_forward.1} parent=5 // pred_fallthru
      _
    %p274 = scmp.lt.s32.totalorder %s15, 2
    // Predicated region
    $region45: #{simple_nn_forward.1} parent=5 // pred_check
      %p275 = pneg %p274
    $region46: #{simple_nn_forward.1} parent=5 // pred_check_branch
      %277 = sbr.rel (%p275) target = $region48
    $region47: #{simple_nn_forward.1} parent=5 // pred_region
      // Predicated region
      $region49: #{simple_nn_forward.1} parent=47 // pred_check
        %p278 = pneg %p35
      $region50: #{simple_nn_forward.1} parent=47 // pred_check_branch
        %280 = sbr.rel (%p278) target = $region52
      $region51: #{simple_nn_forward.1} parent=47 // pred_region
        %s281 = smul.u32 2, %s15
        %p282 = scmp.lt.s32.totalorder %s281, 3
        %s283 = scalar_select %p282, %s281, 3
        %s284 = smul.addr %s283, 7
        %s285 = smul.addr %s284, 8
        %s286 = scalar_lea.vmem %s0, %s285
        %s287 = smul.u32 2, %s15
      $region52: #{simple_nn_forward.1} parent=47 // pred_fallthru
        _
    $region48: #{simple_nn_forward.1} parent=5 // pred_fallthru
      _
    %p288 = scmp.le.s32.totalorder 1, %s15
    %p289 = scmp.lt.s32.totalorder %s15, 3
    %p290 = pnand %p288, %p289
    %p291 = pneg %p290
    // Predicated region
    $region53: #{simple_nn_forward.1} parent=5 // pred_check
      _
    $region54: #{simple_nn_forward.1} parent=5 // pred_check_branch
      %293 = sbr.rel (%p290) target = $region56
    $region55: #{simple_nn_forward.1} parent=5 // pred_region
      %s294 = ssub.s32 %s15, 1
      %s295 = smul.u32 2, %s20
      %p296 = scmp.lt.s32.totalorder %s295, 3
      %s297 = scalar_select %p296, %s295, 3
      %s298 = smul.addr %s297, 7
      %s299 = smul.addr %s298, 8
      %s300 = scalar_lea.vmem %s0, %s299
      %p301 = pneg %p41
      %p302 = pneg %p38
      %p303 = pneg %p62
      %p304 = pneg %p59
      %p305 = pneg %p83
      %p306 = pneg %p80
      %p307 = pneg %p104
      %p308 = pneg %p101
      %p309 = pneg %p125
      %p310 = pneg %p122
      %p311 = pneg %p146
      %p312 = pneg %p143
      %p313 = pneg %p167
      %p314 = pneg %p164
      %p315 = pneg %p188
      %p316 = pneg %p185
      %p317 = pneg %p209
      %p318 = pneg %p206
      %p319 = pneg %p235
      %p320 = pneg %p232
      %s321 = smul.u32 2, %s20
      %p322 = scmp.lt.s32.totalorder %s321, 3
      %s323 = scalar_select %p322, %s321, 3
      %s324 = smul.addr %s323, 8
      %s325 = scalar_lea.vmem %s9, %s324
      %s326 = smul.u32 2, %s20
      %p327 = scmp.lt.s32.totalorder %s326, 3
      %s328 = scalar_select %p327, %s326, 3
      %s329 = smul.addr %s328, 7
      %s330 = smul.addr %s329, 8
      %s331 = scalar_lea.vmem %s0, %s330
      %s332 = smul.u32 2, %s20
      %s333 = smul.u32 2, %s20
      %p334 = scmp.lt.s32.totalorder %s333, 3
      %s335 = scalar_select %p334, %s333, 3
      %s336 = smul.addr %s335, 8
      %s337 = scalar_lea.vmem %s9, %s336
      %s338 = smul.u32 2, %s20
      %v340 = vld [vmem:[%s331] sm:$0xff]
      %v341 = vld [vmem:[%s331 + $0x8] sm:$0xff]
      %v342 = vld [vmem:[%s331 + $0x10] sm:$0xff]
      %v343 = vld [vmem:[%s331 + $0x18] sm:$0xff]
      %v344 = vld [vmem:[%s331 + $0x20] sm:$0xff]
      %v345 = vld [vmem:[%s331 + $0x28] sm:$0xff]
      %v346 = vld [vmem:[%s331 + $0x30] sm:$0xff]
      %v347 = vld [vmem:[%s331 + $0x38] sm:$0xff]
      %v348 = vld [vmem:[%s331 + $0x40] sm:$0xff]
      %v349 = vld [vmem:[%s331 + $0x48] sm:$0xff]
      %v350 = vld [vmem:[%s331 + $0x50] sm:$0xff]
      %v351 = vld [vmem:[%s331 + $0x58] sm:$0xff]
      %v352 = vld [vmem:[%s331 + $0x60] sm:$0xff]
      %v353 = vld [vmem:[%s331 + $0x68] sm:$0xff]
      %v354 = vpack.c.bf16 %v347, %v340
      %v355 = vpack.c.bf16 %v348, %v341
      %v356 = vpack.c.bf16 %v349, %v342
      %v357 = vpack.c.bf16 %v350, %v343
      %v358 = vpack.c.bf16 %v351, %v344
      %v359 = vpack.c.bf16 %v352, %v345
      %v360 = vpack.c.bf16 %v353, %v346
      %v361 = vld [vmem:[%s1] sm:$0xff]
      %v362 = vld [vmem:[%s1 + $0x8] sm:$0xff]
      %v363 = vld [vmem:[%s1 + $0x10] sm:$0xff]
      %v364 = vld [vmem:[%s1 + $0x18] sm:$0xff]
      %v365 = vld [vmem:[%s1 + $0x20] sm:$0xff]
      %v366 = vld [vmem:[%s1 + $0x28] sm:$0xff]
      %v367 = vld [vmem:[%s1 + $0x30] sm:$0xff]
      %v368 = vld [vmem:[%s1 + $0x38] sm:$0xff]
      %v369 = vld [vmem:[%s1 + $0x40] sm:$0xff]
      %v370 = vld [vmem:[%s1 + $0x48] sm:$0xff]
      %v371 = vld [vmem:[%s1 + $0x50] sm:$0xff]
      %v372 = vld [vmem:[%s1 + $0x58] sm:$0xff]
      %v373 = vld [vmem:[%s1 + $0x60] sm:$0xff]
      %v374 = vld [vmem:[%s1 + $0x68] sm:$0xff]
      %v375 = vld [vmem:[%s1 + $0x70] sm:$0xff]
      %v376 = vld [vmem:[%s1 + $0x78] sm:$0xff]
      %v377 = vld [vmem:[%s1 + $0x80] sm:$0xff]
      %v378 = vld [vmem:[%s1 + $0x88] sm:$0xff]
      %v379 = vld [vmem:[%s1 + $0x90] sm:$0xff]
      %v380 = vld [vmem:[%s1 + $0x98] sm:$0xff]
      %v381 = vld [vmem:[%s1 + $0xa0] sm:$0xff]
      %v382 = vld [vmem:[%s1 + $0xa8] sm:$0xff]
      %v383 = vld [vmem:[%s1 + $0xb0] sm:$0xff]
      %v384 = vld [vmem:[%s1 + $0xb8] sm:$0xff]
      %v385 = vld [vmem:[%s1 + $0xc0] sm:$0xff]
      %v386 = vld [vmem:[%s1 + $0xc8] sm:$0xff]
      %v387 = vld [vmem:[%s1 + $0xd0] sm:$0xff]
      %v388 = vld [vmem:[%s1 + $0xd8] sm:$0xff]
      %v389 = vld [vmem:[%s1 + $0xe0] sm:$0xff]
      %v390 = vld [vmem:[%s1 + $0xe8] sm:$0xff]
      %v391 = vld [vmem:[%s1 + $0xf0] sm:$0xff]
      %v392 = vld [vmem:[%s1 + $0xf8] sm:$0xff]
      %v393 = vld [vmem:[%s1 + $0x100] sm:$0xff]
      %v394 = vld [vmem:[%s1 + $0x108] sm:$0xff]
      %v395 = vld [vmem:[%s1 + $0x110] sm:$0xff]
      %v396 = vld [vmem:[%s1 + $0x118] sm:$0xff]
      %v397 = vld [vmem:[%s1 + $0x120] sm:$0xff]
      %v398 = vld [vmem:[%s1 + $0x128] sm:$0xff]
      %v399 = vld [vmem:[%s1 + $0x130] sm:$0xff]
      %v400 = vld [vmem:[%s1 + $0x138] sm:$0xff]
      %v401 = vld [vmem:[%s1 + $0x140] sm:$0xff]
      %v402 = vld [vmem:[%s1 + $0x148] sm:$0xff]
      %v403 = vld [vmem:[%s1 + $0x150] sm:$0xff]
      %v404 = vld [vmem:[%s1 + $0x158] sm:$0xff]
      %v405 = vld [vmem:[%s1 + $0x160] sm:$0xff]
      %v406 = vld [vmem:[%s1 + $0x168] sm:$0xff]
      %v407 = vld [vmem:[%s1 + $0x170] sm:$0xff]
      %v408 = vld [vmem:[%s1 + $0x178] sm:$0xff]
      %v409 = vld [vmem:[%s1 + $0x180] sm:$0xff]
      %v410 = vld [vmem:[%s1 + $0x188] sm:$0xff]
      %v411 = vld [vmem:[%s1 + $0x190] sm:$0xff]
      %v412 = vld [vmem:[%s1 + $0x198] sm:$0xff]
      %v413 = vld [vmem:[%s1 + $0x1a0] sm:$0xff]
      %v414 = vld [vmem:[%s1 + $0x1a8] sm:$0xff]
      %v415 = vld [vmem:[%s1 + $0x1b0] sm:$0xff]
      %v416 = vld [vmem:[%s1 + $0x1b8] sm:$0xff]
      %v417 = vld [vmem:[%s1 + $0x1c0] sm:$0xff]
      %v418 = vld [vmem:[%s1 + $0x1c8] sm:$0xff]
      %v419 = vld [vmem:[%s1 + $0x1d0] sm:$0xff]
      %v420 = vld [vmem:[%s1 + $0x1d8] sm:$0xff]
      %v421 = vld [vmem:[%s1 + $0x1e0] sm:$0xff]
      %v422 = vld [vmem:[%s1 + $0x1e8] sm:$0xff]
      %v423 = vld [vmem:[%s1 + $0x1f0] sm:$0xff]
      %v424 = vld [vmem:[%s1 + $0x1f8] sm:$0xff]
      %v425 = vld [vmem:[%s1 + $0x200] sm:$0xff]
      %v426 = vld [vmem:[%s1 + $0x208] sm:$0xff]
      %v427 = vld [vmem:[%s1 + $0x210] sm:$0xff]
      %v428 = vld [vmem:[%s1 + $0x218] sm:$0xff]
      %v429 = vld [vmem:[%s1 + $0x220] sm:$0xff]
      %v430 = vld [vmem:[%s1 + $0x228] sm:$0xff]
      %v431 = vld [vmem:[%s1 + $0x230] sm:$0xff]
      %v432 = vld [vmem:[%s1 + $0x238] sm:$0xff]
      %v433 = vld [vmem:[%s1 + $0x240] sm:$0xff]
      %v434 = vld [vmem:[%s1 + $0x248] sm:$0xff]
      %v435 = vld [vmem:[%s1 + $0x250] sm:$0xff]
      %v436 = vld [vmem:[%s1 + $0x258] sm:$0xff]
      %v437 = vld [vmem:[%s1 + $0x260] sm:$0xff]
      %v438 = vld [vmem:[%s1 + $0x268] sm:$0xff]
      %v439 = vld [vmem:[%s1 + $0x270] sm:$0xff]
      %v440 = vld [vmem:[%s1 + $0x278] sm:$0xff]
      %v441 = vld [vmem:[%s1 + $0x280] sm:$0xff]
      %v442 = vld [vmem:[%s1 + $0x288] sm:$0xff]
      %v443 = vld [vmem:[%s1 + $0x290] sm:$0xff]
      %v444 = vld [vmem:[%s1 + $0x298] sm:$0xff]
      %v445 = vld [vmem:[%s1 + $0x2a0] sm:$0xff]
      %v446 = vld [vmem:[%s1 + $0x2a8] sm:$0xff]
      %v447 = vld [vmem:[%s1 + $0x2b0] sm:$0xff]
      %v448 = vld [vmem:[%s1 + $0x2b8] sm:$0xff]
      %v449 = vld [vmem:[%s1 + $0x2c0] sm:$0xff]
      %v450 = vld [vmem:[%s1 + $0x2c8] sm:$0xff]
      %v451 = vld [vmem:[%s1 + $0x2d0] sm:$0xff]
      %v452 = vld [vmem:[%s1 + $0x2d8] sm:$0xff]
      %v453 = vld [vmem:[%s1 + $0x2e0] sm:$0xff]
      %v454 = vld [vmem:[%s1 + $0x2e8] sm:$0xff]
      %v455 = vld [vmem:[%s1 + $0x2f0] sm:$0xff]
      %v456 = vld [vmem:[%s1 + $0x2f8] sm:$0xff]
      %v457 = vld [vmem:[%s1 + $0x300] sm:$0xff]
      %v458 = vld [vmem:[%s1 + $0x308] sm:$0xff]
      %v459 = vld [vmem:[%s2] sm:$0x3]
      %v461 = vlaneseq
      %v462 = vshrl.u32 %v461, 7
      %v463 = vsub.s32 0, %v462
      %v464 = vrot.slane %v459, %v463
      %v465 = vlaneseq
      %v466 = vshrl.u32 %v465, 7
      %v467 = vsub.s32 1, %v466
      %v468 = vrot.slane %v459, %v467
      %v569 = vunpack.c.l.b16 %v361
      %v570 = vunpack.c.h.b16 %v361
      %v571 = vunpack.c.l.b16 %v362
      %v572 = vunpack.c.h.b16 %v362
      %v573 = vunpack.c.l.b16 %v363
      %v574 = vunpack.c.h.b16 %v363
      %v575 = vunpack.c.l.b16 %v364
      %v576 = vunpack.c.h.b16 %v364
      %v577 = vunpack.c.l.b16 %v365
      %v578 = vunpack.c.h.b16 %v365
      %v579 = vunpack.c.l.b16 %v366
      %v580 = vunpack.c.h.b16 %v366
      %v581 = vunpack.c.l.b16 %v367
      %v582 = vunpack.c.h.b16 %v367
      %v583 = vunpack.c.l.b16 %v368
      %v584 = vunpack.c.h.b16 %v368
      %v585 = vunpack.c.l.b16 %v369
      %v586 = vunpack.c.h.b16 %v369
      %v587 = vunpack.c.l.b16 %v370
      %v588 = vunpack.c.h.b16 %v370
      %v589 = vunpack.c.l.b16 %v371
      %v590 = vunpack.c.h.b16 %v371
      %v591 = vunpack.c.l.b16 %v372
      %v592 = vunpack.c.h.b16 %v372
      %v593 = vunpack.c.l.b16 %v373
      %v594 = vunpack.c.h.b16 %v373
      %v595 = vunpack.c.l.b16 %v374
      %v596 = vunpack.c.h.b16 %v374
      %v597 = vunpack.c.l.b16 %v375
      %v598 = vunpack.c.h.b16 %v375
      %v599 = vunpack.c.l.b16 %v376
      %v600 = vunpack.c.h.b16 %v376
      %v601 = vunpack.c.l.b16 %v377
      %v602 = vunpack.c.h.b16 %v377
      %v603 = vunpack.c.l.b16 %v378
      %v604 = vunpack.c.h.b16 %v378
      %v605 = vunpack.c.l.b16 %v379
      %v606 = vunpack.c.h.b16 %v379
      %v607 = vunpack.c.l.b16 %v380
      %v608 = vunpack.c.h.b16 %v380
      %v609 = vunpack.c.l.b16 %v381
      %v610 = vunpack.c.h.b16 %v381
      %v611 = vunpack.c.l.b16 %v382
      %v612 = vunpack.c.h.b16 %v382
      %v613 = vunpack.c.l.b16 %v383
      %v614 = vunpack.c.h.b16 %v383
      %v615 = vunpack.c.l.b16 %v384
      %v616 = vunpack.c.h.b16 %v384
      %v617 = vunpack.c.l.b16 %v385
      %v618 = vunpack.c.h.b16 %v385
      %v619 = vunpack.c.l.b16 %v386
      %v620 = vunpack.c.h.b16 %v386
      %v621 = vunpack.c.l.b16 %v387
      %v622 = vunpack.c.h.b16 %v387
      %v623 = vunpack.c.l.b16 %v388
      %v624 = vunpack.c.h.b16 %v388
      %v625 = vunpack.c.l.b16 %v389
      %v626 = vunpack.c.h.b16 %v389
      %v627 = vunpack.c.l.b16 %v390
      %v628 = vunpack.c.h.b16 %v390
      %v629 = vunpack.c.l.b16 %v391
      %v630 = vunpack.c.h.b16 %v391
      %v631 = vunpack.c.l.b16 %v392
      %v632 = vunpack.c.h.b16 %v392
      %v633 = vunpack.c.l.b16 %v393
      %v634 = vunpack.c.h.b16 %v393
      %v635 = vunpack.c.l.b16 %v394
      %v636 = vunpack.c.h.b16 %v394
      %v637 = vunpack.c.l.b16 %v395
      %v638 = vunpack.c.h.b16 %v395
      %v639 = vunpack.c.l.b16 %v396
      %v640 = vunpack.c.h.b16 %v396
      %v641 = vunpack.c.l.b16 %v397
      %v642 = vunpack.c.h.b16 %v397
      %v643 = vunpack.c.l.b16 %v398
      %v644 = vunpack.c.h.b16 %v398
      %v645 = vunpack.c.l.b16 %v399
      %v646 = vunpack.c.h.b16 %v399
      %v647 = vunpack.c.l.b16 %v400
      %v648 = vunpack.c.h.b16 %v400
      %v649 = vunpack.c.l.b16 %v401
      %v650 = vunpack.c.h.b16 %v401
      %v651 = vunpack.c.l.b16 %v402
      %v652 = vunpack.c.h.b16 %v402
      %v653 = vunpack.c.l.b16 %v403
      %v654 = vunpack.c.h.b16 %v403
      %v655 = vunpack.c.l.b16 %v404
      %v656 = vunpack.c.h.b16 %v404
      %v657 = vunpack.c.l.b16 %v405
      %v658 = vunpack.c.h.b16 %v405
      %v659 = vunpack.c.l.b16 %v406
      %v660 = vunpack.c.h.b16 %v406
      %v661 = vunpack.c.l.b16 %v407
      %v662 = vunpack.c.h.b16 %v407
      %v663 = vunpack.c.l.b16 %v408
      %v664 = vunpack.c.h.b16 %v408
      %v665 = vunpack.c.l.b16 %v409
      %v666 = vunpack.c.h.b16 %v409
      %v667 = vunpack.c.l.b16 %v410
      %v668 = vunpack.c.h.b16 %v410
      %v669 = vunpack.c.l.b16 %v411
      %v670 = vunpack.c.h.b16 %v411
      %v671 = vunpack.c.l.b16 %v412
      %v672 = vunpack.c.h.b16 %v412
      %v673 = vunpack.c.l.b16 %v413
      %v674 = vunpack.c.h.b16 %v413
      %v675 = vunpack.c.l.b16 %v414
      %v676 = vunpack.c.h.b16 %v414
      %v677 = vunpack.c.l.b16 %v415
      %v678 = vunpack.c.h.b16 %v415
      %v679 = vunpack.c.l.b16 %v416
      %v680 = vunpack.c.h.b16 %v416
      %v681 = vunpack.c.l.b16 %v417
      %v682 = vunpack.c.h.b16 %v417
      %v683 = vunpack.c.l.b16 %v418
      %v684 = vunpack.c.h.b16 %v418
      %v685 = vunpack.c.l.b16 %v419
      %v686 = vunpack.c.h.b16 %v419
      %v687 = vunpack.c.l.b16 %v420
      %v688 = vunpack.c.h.b16 %v420
      %v689 = vunpack.c.l.b16 %v421
      %v690 = vunpack.c.h.b16 %v421
      %v691 = vunpack.c.l.b16 %v422
      %v692 = vunpack.c.h.b16 %v422
      %v693 = vunpack.c.l.b16 %v423
      %v694 = vunpack.c.h.b16 %v423
      %v695 = vunpack.c.l.b16 %v424
      %v696 = vunpack.c.h.b16 %v424
      %v697 = vunpack.c.l.b16 %v425
      %v698 = vunpack.c.h.b16 %v425
      %v699 = vunpack.c.l.b16 %v426
      %v700 = vunpack.c.h.b16 %v426
      %v701 = vunpack.c.l.b16 %v427
      %v702 = vunpack.c.h.b16 %v427
      %v703 = vunpack.c.l.b16 %v428
      %v704 = vunpack.c.h.b16 %v428
      %v705 = vunpack.c.l.b16 %v429
      %v706 = vunpack.c.h.b16 %v429
      %v707 = vunpack.c.l.b16 %v430
      %v708 = vunpack.c.h.b16 %v430
      %v709 = vunpack.c.l.b16 %v431
      %v710 = vunpack.c.h.b16 %v431
      %v711 = vunpack.c.l.b16 %v432
      %v712 = vunpack.c.h.b16 %v432
      %v713 = vunpack.c.l.b16 %v433
      %v714 = vunpack.c.h.b16 %v433
      %v715 = vunpack.c.l.b16 %v434
      %v716 = vunpack.c.h.b16 %v434
      %v717 = vunpack.c.l.b16 %v435
      %v718 = vunpack.c.h.b16 %v435
      %v719 = vunpack.c.l.b16 %v436
      %v720 = vunpack.c.h.b16 %v436
      %v721 = vunpack.c.l.b16 %v437
      %v722 = vunpack.c.h.b16 %v437
      %v723 = vunpack.c.l.b16 %v438
      %v724 = vunpack.c.h.b16 %v438
      %v725 = vunpack.c.l.b16 %v439
      %v726 = vunpack.c.h.b16 %v439
      %v727 = vunpack.c.l.b16 %v440
      %v728 = vunpack.c.h.b16 %v440
      %v729 = vunpack.c.l.b16 %v441
      %v730 = vunpack.c.h.b16 %v441
      %v731 = vunpack.c.l.b16 %v442
      %v732 = vunpack.c.h.b16 %v442
      %v733 = vunpack.c.l.b16 %v443
      %v734 = vunpack.c.h.b16 %v443
      %v735 = vunpack.c.l.b16 %v444
      %v736 = vunpack.c.h.b16 %v444
      %v737 = vunpack.c.l.b16 %v445
      %v738 = vunpack.c.h.b16 %v445
      %v739 = vunpack.c.l.b16 %v446
      %v740 = vunpack.c.h.b16 %v446
      %v741 = vunpack.c.l.b16 %v447
      %v742 = vunpack.c.h.b16 %v447
      %v743 = vunpack.c.l.b16 %v448
      %v744 = vunpack.c.h.b16 %v448
      %v745 = vunpack.c.l.b16 %v449
      %v746 = vunpack.c.h.b16 %v449
      %v747 = vunpack.c.l.b16 %v450
      %v748 = vunpack.c.h.b16 %v450
      %v749 = vunpack.c.l.b16 %v451
      %v750 = vunpack.c.h.b16 %v451
      %v751 = vunpack.c.l.b16 %v452
      %v752 = vunpack.c.h.b16 %v452
      %v753 = vunpack.c.l.b16 %v453
      %v754 = vunpack.c.h.b16 %v453
      %v755 = vunpack.c.l.b16 %v454
      %v756 = vunpack.c.h.b16 %v454
      %v757 = vunpack.c.l.b16 %v455
      %v758 = vunpack.c.h.b16 %v455
      %v759 = vunpack.c.l.b16 %v456
      %v760 = vunpack.c.h.b16 %v456
      %v761 = vunpack.c.l.b16 %v457
      %v762 = vunpack.c.h.b16 %v457
      %v763 = vunpack.c.l.b16 %v458
      %v764 = vunpack.c.h.b16 %v458
      %v765 = vpack.c.b16 %v571, %v569
      %v766 = vpack.c.b16 %v572, %v570
      %v767 = vpack.c.b16 %v575, %v573
      %v768 = vpack.c.b16 %v576, %v574
      %v769 = vpack.c.b16 %v579, %v577
      %v770 = vpack.c.b16 %v580, %v578
      %v771 = vpack.c.b16 %v583, %v581
      %v772 = vpack.c.b16 %v584, %v582
      %v773 = vpack.c.b16 %v587, %v585
      %v774 = vpack.c.b16 %v588, %v586
      %v775 = vpack.c.b16 %v591, %v589
      %v776 = vpack.c.b16 %v592, %v590
      %v777 = vpack.c.b16 %v595, %v593
      %v778 = vpack.c.b16 %v596, %v594
      %v779 = vpack.c.b16 %v599, %v597
      %v780 = vpack.c.b16 %v600, %v598
      %v781 = vpack.c.b16 %v603, %v601
      %v782 = vpack.c.b16 %v604, %v602
      %v783 = vpack.c.b16 %v607, %v605
      %v784 = vpack.c.b16 %v608, %v606
      %v785 = vpack.c.b16 %v611, %v609
      %v786 = vpack.c.b16 %v612, %v610
      %v787 = vpack.c.b16 %v615, %v613
      %v788 = vpack.c.b16 %v616, %v614
      %v789 = vpack.c.b16 %v619, %v617
      %v790 = vpack.c.b16 %v620, %v618
      %v791 = vpack.c.b16 %v623, %v621
      %v792 = vpack.c.b16 %v624, %v622
      %v793 = vpack.c.b16 %v627, %v625
      %v794 = vpack.c.b16 %v628, %v626
      %v795 = vpack.c.b16 %v631, %v629
      %v796 = vpack.c.b16 %v632, %v630
      %v797 = vpack.c.b16 %v635, %v633
      %v798 = vpack.c.b16 %v636, %v634
      %v799 = vpack.c.b16 %v639, %v637
      %v800 = vpack.c.b16 %v640, %v638
      %v801 = vpack.c.b16 %v643, %v641
      %v802 = vpack.c.b16 %v644, %v642
      %v803 = vpack.c.b16 %v647, %v645
      %v804 = vpack.c.b16 %v648, %v646
      %v805 = vpack.c.b16 %v651, %v649
      %v806 = vpack.c.b16 %v652, %v650
      %v807 = vpack.c.b16 %v655, %v653
      %v808 = vpack.c.b16 %v656, %v654
      %v809 = vpack.c.b16 %v659, %v657
      %v810 = vpack.c.b16 %v660, %v658
      %v811 = vpack.c.b16 %v663, %v661
      %v812 = vpack.c.b16 %v664, %v662
      %v813 = vpack.c.b16 %v667, %v665
      %v814 = vpack.c.b16 %v668, %v666
      %v815 = vpack.c.b16 %v671, %v669
      %v816 = vpack.c.b16 %v672, %v670
      %v817 = vpack.c.b16 %v675, %v673
      %v818 = vpack.c.b16 %v676, %v674
      %v819 = vpack.c.b16 %v679, %v677
      %v820 = vpack.c.b16 %v680, %v678
      %v821 = vpack.c.b16 %v683, %v681
      %v822 = vpack.c.b16 %v684, %v682
      %v823 = vpack.c.b16 %v687, %v685
      %v824 = vpack.c.b16 %v688, %v686
      %v825 = vpack.c.b16 %v691, %v689
      %v826 = vpack.c.b16 %v692, %v690
      %v827 = vpack.c.b16 %v695, %v693
      %v828 = vpack.c.b16 %v696, %v694
      %v829 = vpack.c.b16 %v699, %v697
      %v830 = vpack.c.b16 %v700, %v698
      %v831 = vpack.c.b16 %v703, %v701
      %v832 = vpack.c.b16 %v704, %v702
      %v833 = vpack.c.b16 %v707, %v705
      %v834 = vpack.c.b16 %v708, %v706
      %v835 = vpack.c.b16 %v711, %v709
      %v836 = vpack.c.b16 %v712, %v710
      %v837 = vpack.c.b16 %v715, %v713
      %v838 = vpack.c.b16 %v716, %v714
      %v839 = vpack.c.b16 %v719, %v717
      %v840 = vpack.c.b16 %v720, %v718
      %v841 = vpack.c.b16 %v723, %v721
      %v842 = vpack.c.b16 %v724, %v722
      %v843 = vpack.c.b16 %v727, %v725
      %v844 = vpack.c.b16 %v728, %v726
      %v845 = vpack.c.b16 %v731, %v729
      %v846 = vpack.c.b16 %v732, %v730
      %v847 = vpack.c.b16 %v735, %v733
      %v848 = vpack.c.b16 %v736, %v734
      %v849 = vpack.c.b16 %v739, %v737
      %v850 = vpack.c.b16 %v740, %v738
      %v851 = vpack.c.b16 %v743, %v741
      %v852 = vpack.c.b16 %v744, %v742
      %v853 = vpack.c.b16 %v747, %v745
      %v854 = vpack.c.b16 %v748, %v746
      %v855 = vpack.c.b16 %v751, %v749
      %v856 = vpack.c.b16 %v752, %v750
      %v857 = vpack.c.b16 %v755, %v753
      %v858 = vpack.c.b16 %v756, %v754
      %v859 = vpack.c.b16 %v759, %v757
      %v860 = vpack.c.b16 %v760, %v758
      %v861 = vpack.c.b16 %v763, %v761
      %v862 = vpack.c.b16 %v764, %v762
      %vm961 = vcmask 130048
      %v963 = vsel %vm961, %v360, 0
      %965 = vmatprep.subr.bf16.mxu0 %v766
      %966 = vmatpush1.bf16.msra.mxu0 %v765
      %967 = vmatprep.subr.bf16.mxu0 %v768
      %968 = vmatpush1.bf16.msra.mxu0 %v767
      %969 = vmatprep.subr.bf16.mxu0 %v770
      %970 = vmatpush1.bf16.msra.mxu0 %v769
      %971 = vmatprep.subr.bf16.mxu0 %v772
      %972 = vmatpush1.bf16.msra.mxu0 %v771
      %973 = vmatprep.subr.bf16.mxu0 %v774
      %974 = vmatpush1.bf16.msra.mxu0 %v773
      %975 = vmatprep.subr.bf16.mxu0 %v776
      %976 = vmatpush1.bf16.msra.mxu0 %v775
      %977 = vmatprep.subr.bf16.mxu0 %v778
      %978 = vmatpush1.bf16.msra.mxu0 %v777
      %979 = vmatprep.subr.bf16.mxu0 %v780
      %980 = vmatpush1.bf16.msra.mxu0 %v779
      %981 = vmatprep.subr.bf16.mxu0 %v782
      %982 = vmatpush1.bf16.msra.mxu0 %v781
      %983 = vmatprep.subr.bf16.mxu0 %v784
      %984 = vmatpush1.bf16.msra.mxu0 %v783
      %985 = vmatprep.subr.bf16.mxu0 %v786
      %986 = vmatpush1.bf16.msra.mxu0 %v785
      %987 = vmatprep.subr.bf16.mxu0 %v788
      %988 = vmatpush1.bf16.msra.mxu0 %v787
      %989 = vmatprep.subr.bf16.mxu0 %v790
      %990 = vmatpush1.bf16.msra.mxu0 %v789
      %991 = vmatprep.subr.bf16.mxu0 %v792
      %992 = vmatpush1.bf16.msra.mxu0 %v791
      %993 = vmatprep.subr.bf16.mxu0 %v794
      %994 = vmatpush1.bf16.msra.mxu0 %v793
      %995 = vmatprep.subr.bf16.mxu0 %v796
      %996 = vmatpush1.bf16.msra.mxu0 %v795
      %997 = vmatprep.mubr.bf16.mxu0 %v355
      %998 = vmatmul.mubr.bf16.gmra.mrb[0].mxu0 %v354
      %v999 = vpop.f32.mrb[0].mxu0
      %v1000 = vadd.f32 %v464, %v999
      %v1001 = vpop.f32.mrb[0].mxu0
      %v1002 = vadd.f32 %v468, %v1001
      %v1003 = vpop.f32.mrb[0].mxu0
      %v1004 = vadd.f32 %v464, %v1003
      %v1005 = vpop.f32.mrb[0].mxu0
      %v1006 = vadd.f32 %v468, %v1005
      %1007 = vdwg.mxu0
      %1008 = vmatprep.subr.bf16.mxu0 %v798
      %1009 = vmatpush1.bf16.msra.mxu0 %v797
      %1010 = vmatprep.subr.bf16.mxu0 %v800
      %1011 = vmatpush1.bf16.msra.mxu0 %v799
      %1012 = vmatprep.subr.bf16.mxu0 %v802
      %1013 = vmatpush1.bf16.msra.mxu0 %v801
      %1014 = vmatprep.subr.bf16.mxu0 %v804
      %1015 = vmatpush1.bf16.msra.mxu0 %v803
      %1016 = vmatprep.subr.bf16.mxu0 %v806
      %1017 = vmatpush1.bf16.msra.mxu0 %v805
      %1018 = vmatprep.subr.bf16.mxu0 %v808
      %1019 = vmatpush1.bf16.msra.mxu0 %v807
      %1020 = vmatprep.subr.bf16.mxu0 %v810
      %1021 = vmatpush1.bf16.msra.mxu0 %v809
      %1022 = vmatprep.subr.bf16.mxu0 %v812
      %1023 = vmatpush1.bf16.msra.mxu0 %v811
      %1024 = vmatprep.subr.bf16.mxu0 %v814
      %1025 = vmatpush1.bf16.msra.mxu0 %v813
      %1026 = vmatprep.subr.bf16.mxu0 %v816
      %1027 = vmatpush1.bf16.msra.mxu0 %v815
      %1028 = vmatprep.subr.bf16.mxu0 %v818
      %1029 = vmatpush1.bf16.msra.mxu0 %v817
      %1030 = vmatprep.subr.bf16.mxu0 %v820
      %1031 = vmatpush1.bf16.msra.mxu0 %v819
      %1032 = vmatprep.subr.bf16.mxu0 %v822
      %1033 = vmatpush1.bf16.msra.mxu0 %v821
      %1034 = vmatprep.subr.bf16.mxu0 %v824
      %1035 = vmatpush1.bf16.msra.mxu0 %v823
      %1036 = vmatprep.subr.bf16.mxu0 %v826
      %1037 = vmatpush1.bf16.msra.mxu0 %v825
      %1038 = vmatprep.subr.bf16.mxu0 %v828
      %1039 = vmatpush1.bf16.msra.mxu0 %v827
      %1040 = vmatprep.mubr.bf16.mxu0 %v357
      %1041 = vmatmul.mubr.bf16.gmra.mrb[0].mxu0 %v356
      %v1042 = vpop.f32.mrb[0].mxu0
      %v1043 = vadd.f32 %v1000, %v1042
      %v1044 = vpop.f32.mrb[0].mxu0
      %v1045 = vadd.f32 %v1002, %v1044
      %v1046 = vpop.f32.mrb[0].mxu0
      %v1047 = vadd.f32 %v1004, %v1046
      %v1048 = vpop.f32.mrb[0].mxu0
      %v1049 = vadd.f32 %v1006, %v1048
      %1050 = vdwg.mxu0
      %1051 = vmatprep.subr.bf16.mxu0 %v830
      %1052 = vmatpush1.bf16.msra.mxu0 %v829
      %1053 = vmatprep.subr.bf16.mxu0 %v832
      %1054 = vmatpush1.bf16.msra.mxu0 %v831
      %1055 = vmatprep.subr.bf16.mxu0 %v834
      %1056 = vmatpush1.bf16.msra.mxu0 %v833
      %1057 = vmatprep.subr.bf16.mxu0 %v836
      %1058 = vmatpush1.bf16.msra.mxu0 %v835
      %1059 = vmatprep.subr.bf16.mxu0 %v838
      %1060 = vmatpush1.bf16.msra.mxu0 %v837
      %1061 = vmatprep.subr.bf16.mxu0 %v840
      %1062 = vmatpush1.bf16.msra.mxu0 %v839
      %1063 = vmatprep.subr.bf16.mxu0 %v842
      %1064 = vmatpush1.bf16.msra.mxu0 %v841
      %1065 = vmatprep.subr.bf16.mxu0 %v844
      %1066 = vmatpush1.bf16.msra.mxu0 %v843
      %1067 = vmatprep.subr.bf16.mxu0 %v846
      %1068 = vmatpush1.bf16.msra.mxu0 %v845
      %1069 = vmatprep.subr.bf16.mxu0 %v848
      %1070 = vmatpush1.bf16.msra.mxu0 %v847
      %1071 = vmatprep.subr.bf16.mxu0 %v850
      %1072 = vmatpush1.bf16.msra.mxu0 %v849
      %1073 = vmatprep.subr.bf16.mxu0 %v852
      %1074 = vmatpush1.bf16.msra.mxu0 %v851
      %1075 = vmatprep.subr.bf16.mxu0 %v854
      %1076 = vmatpush1.bf16.msra.mxu0 %v853
      %1077 = vmatprep.subr.bf16.mxu0 %v856
      %1078 = vmatpush1.bf16.msra.mxu0 %v855
      %1079 = vmatprep.subr.bf16.mxu0 %v858
      %1080 = vmatpush1.bf16.msra.mxu0 %v857
      %1081 = vmatprep.subr.bf16.mxu0 %v860
      %1082 = vmatpush1.bf16.msra.mxu0 %v859
      %1083 = vmatprep.mubr.bf16.mxu0 %v359
      %1084 = vmatmul.mubr.bf16.gmra.mrb[0].mxu0 %v358
      %v1085 = vpop.f32.mrb[0].mxu0
      %v1086 = vadd.f32 %v1043, %v1085
      %v1087 = vpop.f32.mrb[0].mxu0
      %v1088 = vadd.f32 %v1045, %v1087
      %v1089 = vpop.f32.mrb[0].mxu0
      %v1090 = vadd.f32 %v1047, %v1089
      %v1091 = vpop.f32.mrb[0].mxu0
      %v1092 = vadd.f32 %v1049, %v1091
      %1093 = vdwg.mxu0
      %1094 = vmatprep.subr.bf16.mxu0 %v862
      %1095 = vmatpush1.bf16.msra.mxu0 %v861
      %1096 = vmatprep.subr.bf16.mxu0 0
      %1097 = vmatpush1.bf16.msra.mxu0 0
      %1098 = vmatprep.subr.bf16.mxu0 0
      %1099 = vmatpush1.bf16.msra.mxu0 0
      %1100 = vmatprep.subr.bf16.mxu0 0
      %1101 = vmatpush1.bf16.msra.mxu0 0
      %1102 = vmatprep.subr.bf16.mxu0 0
      %1103 = vmatpush1.bf16.msra.mxu0 0
      %1104 = vmatprep.subr.bf16.mxu0 0
      %1105 = vmatpush1.bf16.msra.mxu0 0
      %1106 = vmatprep.subr.bf16.mxu0 0
      %1107 = vmatpush1.bf16.msra.mxu0 0
      %1108 = vmatprep.subr.bf16.mxu0 0
      %1109 = vmatpush1.bf16.msra.mxu0 0
      %1110 = vmatprep.subr.bf16.mxu0 0
      %1111 = vmatpush1.bf16.msra.mxu0 0
      %1112 = vmatprep.subr.bf16.mxu0 0
      %1113 = vmatpush1.bf16.msra.mxu0 0
      %1114 = vmatprep.subr.bf16.mxu0 0
      %1115 = vmatpush1.bf16.msra.mxu0 0
      %1116 = vmatprep.subr.bf16.mxu0 0
      %1117 = vmatpush1.bf16.msra.mxu0 0
      %1118 = vmatprep.subr.bf16.mxu0 0
      %1119 = vmatpush1.bf16.msra.mxu0 0
      %1120 = vmatprep.subr.bf16.mxu0 0
      %1121 = vmatpush1.bf16.msra.mxu0 0
      %1122 = vmatprep.subr.bf16.mxu0 0
      %1123 = vmatpush1.bf16.msra.mxu0 0
      %1124 = vmatprep.subr.bf16.mxu0 0
      %1125 = vmatpush1.bf16.msra.mxu0 0
      %1126 = vmatprep.mubr.bf16.mxu0 0
      %1127 = vmatmul.mubr.bf16.gmra.mrb[0].mxu0 %v963
      %v1128 = vpop.f32.mrb[0].mxu0
      %v1129 = vadd.f32 %v1086, %v1128
      %v1130 = vpop.f32.mrb[0].mxu0
      %v1131 = vadd.f32 %v1088, %v1130
      %v1132 = vpop.f32.mrb[0].mxu0
      %v1133 = vadd.f32 %v1090, %v1132
      %v1134 = vpop.f32.mrb[0].mxu0
      %v1135 = vadd.f32 %v1092, %v1134
      %1136 = vdwg.mxu0
      %v1137 = vmax.f32 %v1129, 0.0
      %v1138 = vmax.f32 %v1131, 0.0
      %v1139 = vmax.f32 %v1133, 0.0
      %v1140 = vmax.f32 %v1135, 0.0
      %v1141 = vpack.c.bf16 %v1139, %v1137
      %v1142 = vpack.c.bf16 %v1140, %v1138
      %v1143 = vld [vmem:[%s3] sm:$0xf]
      %v1144 = vld [vmem:[%s3 + $0x4] sm:$0xf]
      %v1145 = vld [vmem:[%s3 + $0x8] sm:$0xf]
      %v1146 = vld [vmem:[%s3 + $0xc] sm:$0xf]
      %v1147 = vld [vmem:[%s3 + $0x10] sm:$0xf]
      %v1148 = vld [vmem:[%s3 + $0x14] sm:$0xf]
      %v1149 = vld [vmem:[%s3 + $0x18] sm:$0xf]
      %v1150 = vld [vmem:[%s3 + $0x1c] sm:$0xf]
      %v1151 = vld [vmem:[%s3 + $0x20] sm:$0xf]
      %v1152 = vld [vmem:[%s3 + $0x24] sm:$0xf]
      %v1153 = vld [vmem:[%s3 + $0x28] sm:$0xf]
      %v1154 = vld [vmem:[%s3 + $0x2c] sm:$0xf]
      %v1155 = vld [vmem:[%s3 + $0x30] sm:$0xf]
      %v1156 = vld [vmem:[%s3 + $0x34] sm:$0xf]
      %v1157 = vld [vmem:[%s3 + $0x38] sm:$0xf]
      %v1158 = vld [vmem:[%s3 + $0x3c] sm:$0xf]
      %v1159 = vld [vmem:[%s3 + $0x40] sm:$0xf]
      %v1160 = vld [vmem:[%s3 + $0x44] sm:$0xf]
      %v1161 = vld [vmem:[%s3 + $0x48] sm:$0xf]
      %v1162 = vld [vmem:[%s3 + $0x4c] sm:$0xf]
      %v1163 = vld [vmem:[%s3 + $0x50] sm:$0xf]
      %v1164 = vld [vmem:[%s3 + $0x54] sm:$0xf]
      %v1165 = vld [vmem:[%s3 + $0x58] sm:$0xf]
      %v1166 = vld [vmem:[%s3 + $0x5c] sm:$0xf]
      %v1167 = vld [vmem:[%s3 + $0x60] sm:$0xf]
      %v1168 = vld [vmem:[%s3 + $0x64] sm:$0xf]
      %v1169 = vld [vmem:[%s3 + $0x68] sm:$0xf]
      %v1170 = vld [vmem:[%s3 + $0x6c] sm:$0xf]
      %v1171 = vld [vmem:[%s3 + $0x70] sm:$0xf]
      %v1172 = vld [vmem:[%s3 + $0x74] sm:$0xf]
      %v1173 = vld [vmem:[%s3 + $0x78] sm:$0xf]
      %v1174 = vld [vmem:[%s3 + $0x7c] sm:$0xf]
      %v1175 = vld [vmem:[%s4] sm:$0x1]
      %v1177 = vlaneseq
      %v1178 = vshrl.u32 %v1177, 7
      %v1179 = vsub.s32 0, %v1178
      %v1180 = vrot.slane %v1175, %v1179
      %v1214 = vunpack.c.l.b16 %v1143
      %v1215 = vunpack.c.l.b16 %v1144
      %v1216 = vunpack.c.l.b16 %v1145
      %v1217 = vunpack.c.l.b16 %v1146
      %v1218 = vunpack.c.l.b16 %v1147
      %v1219 = vunpack.c.l.b16 %v1148
      %v1220 = vunpack.c.l.b16 %v1149
      %v1221 = vunpack.c.l.b16 %v1150
      %v1222 = vunpack.c.l.b16 %v1151
      %v1223 = vunpack.c.l.b16 %v1152
      %v1224 = vunpack.c.l.b16 %v1153
      %v1225 = vunpack.c.l.b16 %v1154
      %v1226 = vunpack.c.l.b16 %v1155
      %v1227 = vunpack.c.l.b16 %v1156
      %v1228 = vunpack.c.l.b16 %v1157
      %v1229 = vunpack.c.l.b16 %v1158
      %v1230 = vunpack.c.l.b16 %v1159
      %v1231 = vunpack.c.l.b16 %v1160
      %v1232 = vunpack.c.l.b16 %v1161
      %v1233 = vunpack.c.l.b16 %v1162
      %v1234 = vunpack.c.l.b16 %v1163
      %v1235 = vunpack.c.l.b16 %v1164
      %v1236 = vunpack.c.l.b16 %v1165
      %v1237 = vunpack.c.l.b16 %v1166
      %v1238 = vunpack.c.l.b16 %v1167
      %v1239 = vunpack.c.l.b16 %v1168
      %v1240 = vunpack.c.l.b16 %v1169
      %v1241 = vunpack.c.l.b16 %v1170
      %v1242 = vunpack.c.l.b16 %v1171
      %v1243 = vunpack.c.l.b16 %v1172
      %v1244 = vunpack.c.l.b16 %v1173
      %v1245 = vunpack.c.l.b16 %v1174
      %v1246 = vpack.c.b16 %v1215, %v1214
      %v1247 = vpack.c.b16 %v1217, %v1216
      %v1248 = vpack.c.b16 %v1219, %v1218
      %v1249 = vpack.c.b16 %v1221, %v1220
      %v1250 = vpack.c.b16 %v1223, %v1222
      %v1251 = vpack.c.b16 %v1225, %v1224
      %v1252 = vpack.c.b16 %v1227, %v1226
      %v1253 = vpack.c.b16 %v1229, %v1228
      %v1254 = vpack.c.b16 %v1231, %v1230
      %v1255 = vpack.c.b16 %v1233, %v1232
      %v1256 = vpack.c.b16 %v1235, %v1234
      %v1257 = vpack.c.b16 %v1237, %v1236
      %v1258 = vpack.c.b16 %v1239, %v1238
      %v1259 = vpack.c.b16 %v1241, %v1240
      %v1260 = vpack.c.b16 %v1243, %v1242
      %v1261 = vpack.c.b16 %v1245, %v1244
      %1278 = vmatprep.subr.bf16.mxu0 0
      %1279 = vmatpush1.bf16.msra.mxu0 %v1246
      %1280 = vmatprep.subr.bf16.mxu0 0
      %1281 = vmatpush1.bf16.msra.mxu0 %v1247
      %1282 = vmatprep.subr.bf16.mxu0 0
      %1283 = vmatpush1.bf16.msra.mxu0 %v1248
      %1284 = vmatprep.subr.bf16.mxu0 0
      %1285 = vmatpush1.bf16.msra.mxu0 %v1249
      %1286 = vmatprep.subr.bf16.mxu0 0
      %1287 = vmatpush1.bf16.msra.mxu0 %v1250
      %1288 = vmatprep.subr.bf16.mxu0 0
      %1289 = vmatpush1.bf16.msra.mxu0 %v1251
      %1290 = vmatprep.subr.bf16.mxu0 0
      %1291 = vmatpush1.bf16.msra.mxu0 %v1252
      %1292 = vmatprep.subr.bf16.mxu0 0
      %1293 = vmatpush1.bf16.msra.mxu0 %v1253
      %1294 = vmatprep.subr.bf16.mxu0 0
      %1295 = vmatpush1.bf16.msra.mxu0 %v1254
      %1296 = vmatprep.subr.bf16.mxu0 0
      %1297 = vmatpush1.bf16.msra.mxu0 %v1255
      %1298 = vmatprep.subr.bf16.mxu0 0
      %1299 = vmatpush1.bf16.msra.mxu0 %v1256
      %1300 = vmatprep.subr.bf16.mxu0 0
      %1301 = vmatpush1.bf16.msra.mxu0 %v1257
      %1302 = vmatprep.subr.bf16.mxu0 0
      %1303 = vmatpush1.bf16.msra.mxu0 %v1258
      %1304 = vmatprep.subr.bf16.mxu0 0
      %1305 = vmatpush1.bf16.msra.mxu0 %v1259
      %1306 = vmatprep.subr.bf16.mxu0 0
      %1307 = vmatpush1.bf16.msra.mxu0 %v1260
      %1308 = vmatprep.subr.bf16.mxu0 0
      %1309 = vmatpush1.bf16.msra.mxu0 %v1261
      %1310 = vmatprep.mubr.bf16.mxu0 %v1142
      %1311 = vmatmul.mubr.bf16.gmra.mrb[0].mxu0 %v1141
      %v1312 = vpop.f32.mrb[0].mxu0
      %v1313 = vadd.f32 %v1180, %v1312
      %v1314 = vpop.f32.mrb[0].mxu0
      %v1315 = vpop.f32.mrb[0].mxu0
      %v1316 = vadd.f32 %v1180, %v1315
      %v1317 = vpop.f32.mrb[0].mxu0
      %1318 = vdwg.mxu0
      %v1319 = vmax.f32 %v1313, 0.0
      %v1320 = vmax.f32 %v1316, 0.0
      %v1321 = vpack.c.bf16 %v1320, %v1319
      %v1322 = vld [vmem:[%s5] sm:$0xf]
      %v1323 = vld [vmem:[%s5 + $0x4] sm:$0xf]
      %v1324 = vld [vmem:[%s5 + $0x8] sm:$0xf]
      %v1325 = vld [vmem:[%s5 + $0xc] sm:$0xf]
      %v1326 = vld [vmem:[%s5 + $0x10] sm:$0xf]
      %v1327 = vld [vmem:[%s5 + $0x14] sm:$0xf]
      %v1328 = vld [vmem:[%s5 + $0x18] sm:$0xf]
      %v1329 = vld [vmem:[%s5 + $0x1c] sm:$0xf]
      %v1330 = vld [vmem:[%s5 + $0x20] sm:$0xf]
      %v1331 = vld [vmem:[%s5 + $0x24] sm:$0xf]
      %v1332 = vld [vmem:[%s5 + $0x28] sm:$0xf]
      %v1333 = vld [vmem:[%s5 + $0x2c] sm:$0xf]
      %v1334 = vld [vmem:[%s5 + $0x30] sm:$0xf]
      %v1335 = vld [vmem:[%s5 + $0x34] sm:$0xf]
      %v1336 = vld [vmem:[%s5 + $0x38] sm:$0xf]
      %v1337 = vld [vmem:[%s5 + $0x3c] sm:$0xf]
      %v1338 = vld [vmem:[%s6] sm:$0x1]
      %v1340 = vlaneseq
      %v1341 = vshrl.u32 %v1340, 7
      %v1342 = vsub.s32 0, %v1341
      %v1343 = vrot.slane %v1338, %v1342
      %v1361 = vunpack.c.l.b16 %v1322
      %v1362 = vunpack.c.l.b16 %v1323
      %v1363 = vunpack.c.l.b16 %v1324
      %v1364 = vunpack.c.l.b16 %v1325
      %v1365 = vunpack.c.l.b16 %v1326
      %v1366 = vunpack.c.l.b16 %v1327
      %v1367 = vunpack.c.l.b16 %v1328
      %v1368 = vunpack.c.l.b16 %v1329
      %v1369 = vunpack.c.l.b16 %v1330
      %v1370 = vunpack.c.l.b16 %v1331
      %v1371 = vunpack.c.l.b16 %v1332
      %v1372 = vunpack.c.l.b16 %v1333
      %v1373 = vunpack.c.l.b16 %v1334
      %v1374 = vunpack.c.l.b16 %v1335
      %v1375 = vunpack.c.l.b16 %v1336
      %v1376 = vunpack.c.l.b16 %v1337
      %v1377 = vpack.c.b16 %v1362, %v1361
      %v1378 = vpack.c.b16 %v1364, %v1363
      %v1379 = vpack.c.b16 %v1366, %v1365
      %v1380 = vpack.c.b16 %v1368, %v1367
      %v1381 = vpack.c.b16 %v1370, %v1369
      %v1382 = vpack.c.b16 %v1372, %v1371
      %v1383 = vpack.c.b16 %v1374, %v1373
      %v1384 = vpack.c.b16 %v1376, %v1375
      %1393 = vmatprep.subr.bf16.mxu0 0
      %1394 = vmatpush1.bf16.msra.mxu0 %v1377
      %1395 = vmatprep.subr.bf16.mxu0 0
      %1396 = vmatpush1.bf16.msra.mxu0 %v1378
      %1397 = vmatprep.subr.bf16.mxu0 0
      %1398 = vmatpush1.bf16.msra.mxu0 %v1379
      %1399 = vmatprep.subr.bf16.mxu0 0
      %1400 = vmatpush1.bf16.msra.mxu0 %v1380
      %1401 = vmatprep.subr.bf16.mxu0 0
      %1402 = vmatpush1.bf16.msra.mxu0 %v1381
      %1403 = vmatprep.subr.bf16.mxu0 0
      %1404 = vmatpush1.bf16.msra.mxu0 %v1382
      %1405 = vmatprep.subr.bf16.mxu0 0
      %1406 = vmatpush1.bf16.msra.mxu0 %v1383
      %1407 = vmatprep.subr.bf16.mxu0 0
      %1408 = vmatpush1.bf16.msra.mxu0 %v1384
      %1409 = vmatprep.subr.bf16.mxu0 0
      %1410 = vmatpush1.bf16.msra.mxu0 0
      %1411 = vmatprep.subr.bf16.mxu0 0
      %1412 = vmatpush1.bf16.msra.mxu0 0
      %1413 = vmatprep.subr.bf16.mxu0 0
      %1414 = vmatpush1.bf16.msra.mxu0 0
      %1415 = vmatprep.subr.bf16.mxu0 0
      %1416 = vmatpush1.bf16.msra.mxu0 0
      %1417 = vmatprep.subr.bf16.mxu0 0
      %1418 = vmatpush1.bf16.msra.mxu0 0
      %1419 = vmatprep.subr.bf16.mxu0 0
      %1420 = vmatpush1.bf16.msra.mxu0 0
      %1421 = vmatprep.subr.bf16.mxu0 0
      %1422 = vmatpush1.bf16.msra.mxu0 0
      %1423 = vmatprep.subr.bf16.mxu0 0
      %1424 = vmatpush1.bf16.msra.mxu0 0
      %1425 = vmatprep.mubr.bf16.mxu0 0
      %1426 = vmatmul.mubr.bf16.gmra.mrb[0].mxu0 %v1321
      %v1427 = vpop.f32.mrb[0].mxu0
      %v1428 = vadd.f32 %v1343, %v1427
      %v1429 = vpop.f32.mrb[0].mxu0
      %v1430 = vpop.f32.mrb[0].mxu0
      %v1431 = vadd.f32 %v1343, %v1430
      %v1432 = vpop.f32.mrb[0].mxu0
      %1433 = vdwg.mxu0
      %v1434 = vmax.f32 %v1428, 0.0
      %v1435 = vmax.f32 %v1431, 0.0
      %v1436 = vpack.c.bf16 %v1435, %v1434
      %v1437 = vld [vmem:[%s7] sm:$0xf]
      %v1438 = vld [vmem:[%s7 + $0x4] sm:$0xf]
      %v1439 = vld [vmem:[%s7 + $0x8] sm:$0xf]
      %v1440 = vld [vmem:[%s7 + $0xc] sm:$0xf]
      %v1441 = vld [vmem:[%s7 + $0x10] sm:$0xf]
      %v1442 = vld [vmem:[%s7 + $0x14] sm:$0xf]
      %v1443 = vld [vmem:[%s7 + $0x18] sm:$0xf]
      %v1444 = vld [vmem:[%s7 + $0x1c] sm:$0xf]
      %v1445 = vld [vmem:[%s7 + $0x20] sm:$0xf]
      %v1446 = vld [vmem:[%s7 + $0x24] sm:$0xf]
      %v1447 = vld [vmem:[%s7 + $0x28] sm:$0xf]
      %v1448 = vld [vmem:[%s7 + $0x2c] sm:$0xf]
      %v1449 = vld [vmem:[%s7 + $0x30] sm:$0xf]
      %v1450 = vld [vmem:[%s7 + $0x34] sm:$0xf]
      %v1451 = vld [vmem:[%s7 + $0x38] sm:$0xf]
      %v1452 = vld [vmem:[%s7 + $0x3c] sm:$0xf]
      %v1453 = vld [vmem:[%s8] sm:$0x1]
      %v1455 = vlaneseq
      %v1456 = vshrl.u32 %v1455, 7
      %v1457 = vsub.s32 0, %v1456
      %v1458 = vrot.slane %v1453, %v1457
      %v1476 = vunpack.c.l.b16 %v1437
      %v1477 = vunpack.c.l.b16 %v1438
      %v1478 = vunpack.c.l.b16 %v1439
      %v1479 = vunpack.c.l.b16 %v1440
      %v1480 = vunpack.c.l.b16 %v1441
      %v1481 = vunpack.c.l.b16 %v1442
      %v1482 = vunpack.c.l.b16 %v1443
      %v1483 = vunpack.c.l.b16 %v1444
      %v1484 = vunpack.c.l.b16 %v1445
      %v1485 = vunpack.c.l.b16 %v1446
      %v1486 = vunpack.c.l.b16 %v1447
      %v1487 = vunpack.c.l.b16 %v1448
      %v1488 = vunpack.c.l.b16 %v1449
      %v1489 = vunpack.c.l.b16 %v1450
      %v1490 = vunpack.c.l.b16 %v1451
      %v1491 = vunpack.c.l.b16 %v1452
      %v1492 = vpack.c.b16 %v1477, %v1476
      %v1493 = vpack.c.b16 %v1479, %v1478
      %v1494 = vpack.c.b16 %v1481, %v1480
      %v1495 = vpack.c.b16 %v1483, %v1482
      %v1496 = vpack.c.b16 %v1485, %v1484
      %v1497 = vpack.c.b16 %v1487, %v1486
      %v1498 = vpack.c.b16 %v1489, %v1488
      %v1499 = vpack.c.b16 %v1491, %v1490
      %1508 = vmatprep.subr.bf16.mxu0 0
      %1509 = vmatpush1.bf16.msra.mxu0 %v1492
      %1510 = vmatprep.subr.bf16.mxu0 0
      %1511 = vmatpush1.bf16.msra.mxu0 %v1493
      %1512 = vmatprep.subr.bf16.mxu0 0
      %1513 = vmatpush1.bf16.msra.mxu0 %v1494
      %1514 = vmatprep.subr.bf16.mxu0 0
      %1515 = vmatpush1.bf16.msra.mxu0 %v1495
      %1516 = vmatprep.subr.bf16.mxu0 0
      %1517 = vmatpush1.bf16.msra.mxu0 %v1496
      %1518 = vmatprep.subr.bf16.mxu0 0
      %1519 = vmatpush1.bf16.msra.mxu0 %v1497
      %1520 = vmatprep.subr.bf16.mxu0 0
      %1521 = vmatpush1.bf16.msra.mxu0 %v1498
      %1522 = vmatprep.subr.bf16.mxu0 0
      %1523 = vmatpush1.bf16.msra.mxu0 %v1499
      %1524 = vmatprep.subr.bf16.mxu0 0
      %1525 = vmatpush1.bf16.msra.mxu0 0
      %1526 = vmatprep.subr.bf16.mxu0 0
      %1527 = vmatpush1.bf16.msra.mxu0 0
      %1528 = vmatprep.subr.bf16.mxu0 0
      %1529 = vmatpush1.bf16.msra.mxu0 0
      %1530 = vmatprep.subr.bf16.mxu0 0
      %1531 = vmatpush1.bf16.msra.mxu0 0
      %1532 = vmatprep.subr.bf16.mxu0 0
      %1533 = vmatpush1.bf16.msra.mxu0 0
      %1534 = vmatprep.subr.bf16.mxu0 0
      %1535 = vmatpush1.bf16.msra.mxu0 0
      %1536 = vmatprep.subr.bf16.mxu0 0
      %1537 = vmatpush1.bf16.msra.mxu0 0
      %1538 = vmatprep.subr.bf16.mxu0 0
      %1539 = vmatpush1.bf16.msra.mxu0 0
      %1540 = vmatprep.mubr.bf16.mxu0 0
      %1541 = vmatmul.mubr.bf16.gmra.mrb[0].mxu0 %v1436
      %v1542 = vpop.f32.mrb[0].mxu0
      %v1543 = vadd.f32 %v1458, %v1542
      %v1544 = vpop.f32.mrb[0].mxu0
      %v1545 = vpop.f32.mrb[0].mxu0
      %v1546 = vadd.f32 %v1458, %v1545
      %v1547 = vpop.f32.mrb[0].mxu0
      %1548 = vdwg.mxu0
      %1549 = vst [vmem:[%s337] sm:$0xff] %v1543
      %1550 = vst [vmem:[%s337 + $0x8] sm:$0xff] %v1546
      %s1551 = smul.u32 2, %s20
      %p1552 = scmp.lt.s32.totalorder %s1551, 3
      %s1553 = scalar_select %p1552, %s1551, 3
      %s1554 = smul.addr %s1553, 8
      %s1555 = scalar_lea.vmem %s9, %s1554
      // Predicated region
      $region57: #{simple_nn_forward.1} parent=55 // pred_check
        %p1556 = pneg %p232
      $region58: #{simple_nn_forward.1} parent=55 // pred_check_branch
        %1558 = sbr.rel (%p1556) target = $region60
      $region59: #{simple_nn_forward.1} parent=55 // pred_region
        %s1559 = smul.u32 2, %s20
      $region60: #{simple_nn_forward.1} parent=55 // pred_fallthru
        _
    $region56: #{simple_nn_forward.1} parent=5 // pred_fallthru
      _
    %p1560 = scmp.le.s32.totalorder 2, %s15
    // Predicated region
    $region61: #{simple_nn_forward.1} parent=5 // pred_check
      %p1561 = pneg %p1560
    $region62: #{simple_nn_forward.1} parent=5 // pred_check_branch
      %1563 = sbr.rel (%p1561) target = $region64
    $region63: #{simple_nn_forward.1} parent=5 // pred_region
      %s1564 = ssub.s32 %s15, 2
      // Predicated region
      $region65: #{simple_nn_forward.1} parent=63 // pred_check
        %p1565 = pneg %p238
      $region66: #{simple_nn_forward.1} parent=63 // pred_check_branch
        %1567 = sbr.rel (%p1565) target = $region68
      $region67: #{simple_nn_forward.1} parent=63 // pred_region
        %s1568 = smul.u32 2, %s21
        %p1569 = scmp.lt.s32.totalorder %s1568, 3
        %s1570 = scalar_select %p1569, %s1568, 3
        %s1571 = smul.addr %s1570, 8
        %s1572 = scalar_lea.vmem %s9, %s1571
      $region68: #{simple_nn_forward.1} parent=63 // pred_fallthru
        _
    $region64: #{simple_nn_forward.1} parent=5 // pred_fallthru
      _
  $region6: #{simple_nn_forward.1} parent=0 // loop_footer
    %s19 = sadd.s32 1, %s15
  $region7: #{simple_nn_forward.1} parent=0 // loop_footer_branch
    %14 = sbr.rel target = $region3
  $region8: #{simple_nn_forward.1} parent=0 // loop_exit
    _

</llo_original>
